<compile_context>
chip_gen: v6e
topology: v6e:2x2x1
jax: 0.10.0
libtpu: 0.0.40
codegen_flags: <defaults>
</compile_context>

<pallas_src>
import jax
import jax.numpy as jnp
from jax.experimental import pallas as pl
from jax.experimental.pallas import tpu as pltpu


def _add_conv1x1_kernel(a_ref, b_ref, w_ref, o_ref):
    # a_ref, b_ref: (Cin, M) full feature maps, resident across the grid
    #               (constant block index -> fetched once per core).
    # w_ref:        (1, tile_cout, Cin) bf16 slice of the 1x1-conv weight.
    # o_ref:        (tile_cout, M) f32 slice of the output.
    x = (a_ref[...] + b_ref[...]).astype(jnp.bfloat16)   # fused residual add (VPU)
    o_ref[...] = jnp.dot(                                 # 1x1 conv == W @ X (MXU, f32 acc)
        w_ref[0], x, preferred_element_type=jnp.float32
    ).astype(o_ref.dtype)


def add_conv1x1(x541, x526, weight, *, tile_cout=1032):
    """x541, x526: (N, Cin, H, W) float32.  weight: (Cout, Cin, 1, 1) float32.

    Note: the "free transpose" argument below only holds for N == 1 (which is
    what the module uses); for N > 1 the NCHW<->(C, N*H*W) moves become real
    HBM transposes (still correct, just more traffic).
    """
    N, Cin, H, W = x541.shape
    Cout = weight.shape[0]
    M = N * H * W

    # Only divisors of Cout that are multiples of 8 are valid tile sizes
    # (344 / 688 / 1032 / 2064 for Cout = 2064).
    assert Cout % tile_cout == 0 and tile_cout % 8 == 0
    n_tiles = Cout // tile_cout

    # NCHW -> (Cin, N*H*W).  For N == 1 the transpose only moves a size-1 axis,
    # so XLA lowers it to a pure (free) reshape — no HBM traffic.
    a = jnp.transpose(x541, (1, 0, 2, 3)).reshape(Cin, M)
    b = jnp.transpose(x526, (1, 0, 2, 3)).reshape(Cin, M)

    # (Cout, Cin, 1, 1) -> (n_tiles, tile_cout, Cin) bf16.  The 3-D layout makes
    # every weight block's last two dims equal the full array dims (no bf16
    # tiling-divisibility issues), and the contiguous reshape is free.  In a
    # real model the weight would be stored in bf16 once, upstream of this op.
    w = weight.reshape(n_tiles, tile_cout, Cin).astype(jnp.bfloat16)

    grid = (n_tiles,)

    cost = pl.CostEstimate(
        flops=2 * M * Cin * Cout,
        transcendentals=0,
        bytes_accessed=4 * (2 * Cin * M + Cout * M) + 2 * Cout * Cin,
    )

    out = pl.pallas_call(
        _add_conv1x1_kernel,
        out_shape=jax.ShapeDtypeStruct((Cout, M), x541.dtype),
        grid=grid,
        in_specs=[
            pl.BlockSpec((Cin, M), lambda i: (0, 0)),               # a (resident)
            pl.BlockSpec((Cin, M), lambda i: (0, 0)),               # b (resident)
            pl.BlockSpec((1, tile_cout, Cin), lambda i: (i, 0, 0)), # weight tile (bf16)
        ],
        out_specs=pl.BlockSpec((tile_cout, M), lambda i: (i, 0)),
        compiler_params=pltpu.CompilerParams(
            # One Cout tile per TensorCore on v7x; harmless elsewhere.
            dimension_semantics=("parallel",),
        ),
        cost_estimate=cost,
    )(a, b, w)

    # (Cout, N*H*W) -> (N, Cout, H, W); again free for N == 1.
    return jnp.transpose(out.reshape(Cout, N, H, W), (1, 0, 2, 3))


if __name__ == "__main__":
    key = jax.random.PRNGKey(0)
    k1, k2, k3 = jax.random.split(key, 3)

    # Shapes from the PyTorch module: (1, 344, 7, 7) inputs,
    # Conv2d(344 -> 2064, kernel 1x1, no bias).
    N, Cin, H, W, Cout = 1, 344, 7, 7, 2064
    x541 = jax.random.normal(k1, (N, Cin, H, W), dtype=jnp.float32)
    x526 = jax.random.normal(k2, (N, Cin, H, W), dtype=jnp.float32)
    weight = jax.random.normal(k3, (Cout, Cin, 1, 1), dtype=jnp.float32) * (1.0 / (Cin ** 0.5))

    y = add_conv1x1(x541, x526, weight)
    y = jax.block_until_ready(y)
    assert y.shape == (N, Cout, H, W), y.shape

    xs = x541 + x526
    w2 = weight.reshape(Cout, Cin)

    # Exact-math reference for the kernel (same bf16 rounding, f32 accumulation).
    ref_bf16 = jnp.einsum(
        "nchw,oc->nohw", xs.astype(jnp.bfloat16), w2.astype(jnp.bfloat16),
        preferred_element_type=jnp.float32,
    )
    assert jnp.allclose(y, ref_bf16, atol=2e-3, rtol=2e-3), "mismatch vs bf16 reference"

    # Full-precision reference (original PyTorch module semantics); bf16
    # weight/activation rounding keeps the deviation within a few 1e-2.
    ref_f32 = jnp.einsum("nchw,oc->nohw", xs, w2)
    assert jnp.allclose(y, ref_f32, atol=5e-2, rtol=5e-2), "mismatch vs f32 reference"

    print("KERNEL_OK")
</pallas_src>

<mosaic_0001>
module attributes {stable_mosaic.version = 11 : i64} {
  func.func @_add_conv1x1_kernel(%arg0: i32, %arg1: memref<344x49xf32, #tpu.memory_space<vmem>>, %arg2: memref<344x49xf32, #tpu.memory_space<vmem>>, %arg3: memref<1x1032x344xbf16, #tpu.memory_space<vmem>>, %arg4: memref<1032x49xf32, #tpu.memory_space<vmem>>) attributes {dimension_semantics = [#tpu.dimension_semantics<parallel>], iteration_bounds = array<i64: 2>, scalar_prefetch = 0 : i64, scratch_operands = 0 : i64, tpu.core_type = #tpu.core_type<tc>, window_params = [{pipeline_mode = #tpu.pipeline_mode<synchronous>, transform_indices = @transform_0, window_bounds = array<i64: 344, 49>}, {pipeline_mode = #tpu.pipeline_mode<synchronous>, transform_indices = @transform_1, window_bounds = array<i64: 344, 49>}, {transform_indices = @transform_2, window_bounds = array<i64: 1, 1032, 344>}, {transform_indices = @transform_3, window_bounds = array<i64: 1032, 49>}]} {
    %c0 = arith.constant 0 : index
    %c0_0 = arith.constant 0 : index
    %0 = vector.load %arg1[%c0, %c0_0] : memref<344x49xf32, #tpu.memory_space<vmem>>, vector<344x49xf32>
    %c0_1 = arith.constant 0 : index
    %c0_2 = arith.constant 0 : index
    %1 = vector.load %arg2[%c0_1, %c0_2] : memref<344x49xf32, #tpu.memory_space<vmem>>, vector<344x49xf32>
    %2 = arith.addf %0, %1 : vector<344x49xf32>
    %3 = arith.truncf %2 : vector<344x49xf32> to vector<344x49xbf16>
    %c0_3 = arith.constant 0 : index
    %c0_4 = arith.constant 0 : index
    %c0_5 = arith.constant 0 : index
    %4 = vector.load %arg3[%c0_3, %c0_4, %c0_5] : memref<1x1032x344xbf16, #tpu.memory_space<vmem>>, vector<1x1032x344xbf16>
    %5 = vector.shape_cast %4 : vector<1x1032x344xbf16> to vector<1032x344xbf16>
    %cst = arith.constant dense<0.000000e+00> : vector<1032x49xf32>
    %6 = tpu.matmul %5, %3, %cst {dimension_numbers = #tpu.dot_dimension_numbers<[1], [0], [0], [1], [0, 0, 1, 1], [], []>} : vector<1032x344xbf16>, vector<344x49xbf16>, vector<1032x49xf32> -> vector<1032x49xf32>
    %c0_6 = arith.constant 0 : index
    %c0_7 = arith.constant 0 : index
    %7 = vector.load %arg4[%c0_6, %c0_7] : memref<1032x49xf32, #tpu.memory_space<vmem>>, vector<1032x49xf32>
    tpu.vector_store %arg4[%c0_6, %c0_7], %6 {strides = array<i32>} : memref<1032x49xf32, #tpu.memory_space<vmem>>, vector<1032x49xf32>,
    return
  }
  func.func @transform_0(%arg0: i32) -> (i32, i32) {
    %c0_i32 = arith.constant 0 : i32
    %c0_i32_0 = arith.constant 0 : i32
    %c0_i32_1 = arith.constant 0 : i32
    return %c0_i32, %c0_i32_0 : i32, i32
  }
  func.func @transform_1(%arg0: i32) -> (i32, i32) {
    %c0_i32 = arith.constant 0 : i32
    %c0_i32_0 = arith.constant 0 : i32
    %c0_i32_1 = arith.constant 0 : i32
    return %c0_i32, %c0_i32_0 : i32, i32
  }
  func.func @transform_2(%arg0: i32) -> (i32, i32, i32) {
    %c0_i32 = arith.constant 0 : i32
    %c0_i32_0 = arith.constant 0 : i32
    %c0_i32_1 = arith.constant 0 : i32
    return %arg0, %c0_i32, %c0_i32_0 : i32, i32, i32
  }
  func.func @transform_3(%arg0: i32) -> (i32, i32) {
    %c0_i32 = arith.constant 0 : i32
    %c0_i32_0 = arith.constant 0 : i32
    return %arg0, %c0_i32 : i32, i32
  }
}

</mosaic_0001>

<llo_original>
// kernel: tpu_custom_call.1
$region0: #{tpu_custom_call.1}
  #allocation0 [shape = 'u32[]', space=smem, size = 0x4, offset = 0x4, fixed_abs, tag = 'smem constant byte address 0x4 - core index']
  #allocation1 [shape = 'u32[144,128]{1,0:T(1,128)}', space=vmem, size = 0x12000, scoped, tag = 'internal scratch']
  %s0 = inlined_call_operand.vmem [shape: f32[344,49], index: 0, kind: input, shape index: {}]
  %s1 = inlined_call_operand.vmem [shape: f32[344,49], index: 1, kind: input, shape index: {}]
  %s2 = inlined_call_operand.hbm [shape: bf16[2,1032,344], index: 2, kind: input, shape index: {}]
  %s3 = inlined_call_operand.vmem [shape: f32[2064,49], index: 3, kind: output, shape index: {}]
  %s4 = sld [smem:[#allocation0]]
  $region49: #{tpu_custom_call.1} parent=0
    _
  %s6 = ssub.s32 1, %s4
  %s7 = scalar_select 0, %s6, %s4
  $region1: #{tpu_custom_call.1} parent=0
    #allocation2 [shape = 'u8[1585152]{0}', space=vmem, size = 0x183000, scoped, tag = 'input window, operand 2']
    #allocation3 [shape = 's32[2]{0}', space=sflag, size = 0x8, scoped, tag = 'scoped memory for tpu_custom_call.1']
    %8 = vsyncpa [#allocation3], 0
    %s9 = scalar_lea.sflag [#allocation3], 1
    %10 = vsyncpa %s9, 0
    loop: start=0, step=1, limit=4
    $region2: #{tpu_custom_call.1} parent=1 // loop_pre_header
      _
    $region3: #{tpu_custom_call.1} parent=1 // loop_header
      %s12 = sphi 0, %s16
      %p13 = scmp.ge.s32.totalorder %s12, 4
      %s20 = sphi 0, %s20
      %s22 = sphi 0, %s20
      %s23 = sphi 0, %s22
      %s37 = sphi 0, %s23
      %s41 = sphi 0, %s41
      %s43 = sphi 0, %s41
      %s44 = sphi 0, %s43
      %s58 = sphi 0, %s44
      %s64 = sphi 0, %s66
      %s67 = sphi 0, %s64
      %s68 = sphi 0, %s67
      %s84 = sphi 0, %s68
      %s90 = sphi 0, %s92
      %s93 = sphi 0, %s90
      %s94 = sphi 0, %s93
      %s110 = sphi 0, %s94
    $region4: #{tpu_custom_call.1} parent=1 // loop_header_branch
      %15 = sbr.rel (%p13) target = $region8
    $region5: #{tpu_custom_call.1} parent=1 // loop_body
      %s17 = ssub.s32 %s12, 1
      %s18 = ssub.s32 %s12, 2
      %s19 = sadd.s32 %s12, 1
      %s21 = sadd.s32 %s20, 1
      %p24 = scmp.eq.s32.totalorder %s12, 1
      %p25 = scmp.ne.s32.totalorder %s20, %s22
      %p26 = scmp.eq.s32.totalorder %s12, 0
      %p27 = por %p25, %p26
      %p28 = scmp.ne.s32.totalorder %s20, %s22
      %p29 = scmp.eq.s32.totalorder %s17, 1
      %p30 = por %p28, %p29
      %p31 = scmp.ne.s32.totalorder %s22, %s23
      %p32 = scmp.eq.s32.totalorder %s17, 0
      %p33 = por %p31, %p32
      %p34 = scmp.ne.s32.totalorder %s22, %s23
      %p35 = scmp.eq.s32.totalorder %s18, 1
      %p36 = por %p34, %p35
      %p38 = scmp.ne.s32.totalorder %s23, %s37
      %p39 = scmp.eq.s32.totalorder %s18, 0
      %p40 = por %p38, %p39
      %s42 = sadd.s32 %s41, 1
      %p45 = scmp.eq.s32.totalorder %s12, 1
      %p46 = scmp.ne.s32.totalorder %s41, %s43
      %p47 = scmp.eq.s32.totalorder %s12, 0
      %p48 = por %p46, %p47
      %p49 = scmp.ne.s32.totalorder %s41, %s43
      %p50 = scmp.eq.s32.totalorder %s17, 1
      %p51 = por %p49, %p50
      %p52 = scmp.ne.s32.totalorder %s43, %s44
      %p53 = scmp.eq.s32.totalorder %s17, 0
      %p54 = por %p52, %p53
      %p55 = scmp.ne.s32.totalorder %s43, %s44
      %p56 = scmp.eq.s32.totalorder %s18, 1
      %p57 = por %p55, %p56
      %p59 = scmp.ne.s32.totalorder %s44, %s58
      %p60 = scmp.eq.s32.totalorder %s18, 0
      %p61 = por %p59, %p60
      %s62 = ssub.s32 %s12, %s19
      %p63 = scmp.eq.s32.totalorder %s62, 0
      %s65 = sadd.s32 %s64, 1
      %s66 = scalar_select %p63, %s64, %s65
      %p69 = pneg %p63
      %p70 = scmp.eq.s32.totalorder %s12, 1
      %p71 = por %p69, %p70
      %p72 = scmp.ne.s32.totalorder %s64, %s67
      %p73 = scmp.eq.s32.totalorder %s12, 0
      %p74 = por %p72, %p73
      %p75 = scmp.ne.s32.totalorder %s64, %s67
      %p76 = scmp.eq.s32.totalorder %s17, 1
      %p77 = por %p75, %p76
      %p78 = scmp.ne.s32.totalorder %s67, %s68
      %p79 = scmp.eq.s32.totalorder %s17, 0
      %p80 = por %p78, %p79
      %p81 = scmp.ne.s32.totalorder %s67, %s68
      %p82 = scmp.eq.s32.totalorder %s18, 1
      %p83 = por %p81, %p82
      %p85 = scmp.ne.s32.totalorder %s68, %s84
      %p86 = scmp.eq.s32.totalorder %s18, 0
      %p87 = por %p85, %p86
      %s88 = ssub.s32 %s12, %s19
      %p89 = scmp.eq.s32.totalorder %s88, 0
      %s91 = sadd.s32 %s90, 1
      %s92 = scalar_select %p89, %s90, %s91
      %p95 = pneg %p89
      %p96 = scmp.eq.s32.totalorder %s12, 1
      %p97 = por %p95, %p96
      %p98 = scmp.ne.s32.totalorder %s90, %s93
      %p99 = scmp.eq.s32.totalorder %s12, 0
      %p100 = por %p98, %p99
      %p101 = scmp.ne.s32.totalorder %s90, %s93
      %p102 = scmp.eq.s32.totalorder %s17, 1
      %p103 = por %p101, %p102
      %p104 = scmp.ne.s32.totalorder %s93, %s94
      %p105 = scmp.eq.s32.totalorder %s17, 0
      %p106 = por %p104, %p105
      %p107 = scmp.ne.s32.totalorder %s93, %s94
      %p108 = scmp.eq.s32.totalorder %s18, 1
      %p109 = por %p107, %p108
      %p111 = scmp.ne.s32.totalorder %s94, %s110
      %p112 = scmp.eq.s32.totalorder %s18, 0
      %p113 = por %p111, %p112
      %p114 = scmp.le.s32.totalorder 1, %s12
      %p115 = scmp.lt.s32.totalorder %s12, 3
      %p116 = pnand %p114, %p115
      %p117 = pneg %p116
      // Predicated region
      $region9: #{tpu_custom_call.1} parent=5 // pred_check
        _
      $region10: #{tpu_custom_call.1} parent=5 // pred_check_branch
        %119 = sbr.rel (%p116) target = $region12
      $region11: #{tpu_custom_call.1} parent=5 // pred_region
        %s120 = ssub.s32 %s12, 1
        // Predicated region
        $region13: #{tpu_custom_call.1} parent=11 // pred_check
          %p121 = pneg %p33
        $region14: #{tpu_custom_call.1} parent=11 // pred_check_branch
          %123 = sbr.rel (%p121) target = $region16
        $region15: #{tpu_custom_call.1} parent=11 // pred_region
          _
        $region16: #{tpu_custom_call.1} parent=11 // pred_fallthru
          _
        // Predicated region
        $region17: #{tpu_custom_call.1} parent=11 // pred_check
          %p124 = pneg %p54
        $region18: #{tpu_custom_call.1} parent=11 // pred_check_branch
          %126 = sbr.rel (%p124) target = $region20
        $region19: #{tpu_custom_call.1} parent=11 // pred_region
          _
        $region20: #{tpu_custom_call.1} parent=11 // pred_fallthru
          _
      $region12: #{tpu_custom_call.1} parent=5 // pred_fallthru
        _
      %p127 = scmp.lt.s32.totalorder %s12, 2
      // Predicated region
      $region21: #{tpu_custom_call.1} parent=5 // pred_check
        %p128 = pneg %p127
      $region22: #{tpu_custom_call.1} parent=5 // pred_check_branch
        %130 = sbr.rel (%p128) target = $region24
      $region23: #{tpu_custom_call.1} parent=5 // pred_region
        // Predicated region
        $region25: #{tpu_custom_call.1} parent=23 // pred_check
          %p131 = pneg %p74
        $region26: #{tpu_custom_call.1} parent=23 // pred_check_branch
          %133 = sbr.rel (%p131) target = $region28
        $region27: #{tpu_custom_call.1} parent=23 // pred_region
          %s134 = sand.u32 %s64, 1
          %s135 = scalar_lea.sflag [#allocation3], %s134
          %s136 = sand.u32 %s64, 1
          %s137 = smul.addr %s136, 1548
          %s138 = scalar_lea.vmem [#allocation2], %s137
          %s140 = ssub.s32 24768, 24768
          %141 = vsyncadd %s135, %s140
          %s142 = smul.addr %s12, 387
          %s143 = smul.addr %s142, 64
          %s144 = scalar_lea.hbm %s2, %s143
          %s145 = sshll.u32 %s138, 4
          %s146 = int_to_ptr.vmem [resolvable:$true] %s145
          %151 = dma.hbm_to_vmem [thread:$0]  %s144, 24768, %s146, %s135, 192, 192, 12
        $region28: #{tpu_custom_call.1} parent=23 // pred_fallthru
          _
      $region24: #{tpu_custom_call.1} parent=5 // pred_fallthru
        _
      %p152 = scmp.le.s32.totalorder 1, %s12
      %p153 = scmp.lt.s32.totalorder %s12, 3
      %p154 = pnand %p152, %p153
      %p155 = pneg %p154
      // Predicated region
      $region29: #{tpu_custom_call.1} parent=5 // pred_check
        _
      $region30: #{tpu_custom_call.1} parent=5 // pred_check_branch
        %157 = sbr.rel (%p154) target = $region32
      $region31: #{tpu_custom_call.1} parent=5 // pred_region
        %s158 = ssub.s32 %s12, 1
        %s159 = sand.u32 %s67, 1
        %s160 = scalar_lea.sflag [#allocation3], %s159
        %s161 = sand.u32 %s67, 1
        %s162 = smul.addr %s161, 1548
        %s163 = scalar_lea.vmem [#allocation2], %s162
        // Predicated region
        $region33: #{tpu_custom_call.1} parent=31 // pred_check
          %p164 = pneg %p80
        $region34: #{tpu_custom_call.1} parent=31 // pred_check_branch
          %166 = sbr.rel (%p164) target = $region36
        $region35: #{tpu_custom_call.1} parent=31 // pred_region
          %167 = dma.done %s160, 24768
        $region36: #{tpu_custom_call.1} parent=31 // pred_fallthru
          _
        %p168 = pneg %p33
        %p169 = pneg %p30
        %p170 = pneg %p54
        %p171 = pneg %p51
        %s172 = sand.u32 %s67, 1
        %s173 = scalar_lea.sflag [#allocation3], %s172
        %s174 = sand.u32 %s67, 1
        %s175 = smul.addr %s174, 1548
        %s176 = scalar_lea.vmem [#allocation2], %s175
        %p177 = pneg %p80
        %p178 = pneg %p77
        %p179 = pneg %p106
        %p180 = pneg %p103
        %s181 = smul.u32 129, %s17
        %p182 = scmp.lt.s32.totalorder %s181, 257
        %s183 = scalar_select %p182, %s181, 257
        %s184 = smul.addr %s183, 8
        %s185 = scalar_lea.vmem %s3, %s184
        %s186 = smul.u32 129, %s17
        %p187 = scmp.lt.s32.totalorder %s186, 257
        %s188 = scalar_select %p187, %s186, 257
        %s189 = smul.addr %s188, 8
        %s190 = scalar_lea.vmem %s3, %s189
        %s191 = smul.u32 129, %s17
        %v193 = vld [vmem:[%s0] sm:$0xff]
        %v194 = vld [vmem:[%s0 + $0x8] sm:$0xff]
        %v195 = vld [vmem:[%s0 + $0x10] sm:$0xff]
        %v196 = vld [vmem:[%s0 + $0x18] sm:$0xff]
        %v197 = vld [vmem:[%s0 + $0x20] sm:$0xff]
        %v198 = vld [vmem:[%s0 + $0x28] sm:$0xff]
        %v199 = vld [vmem:[%s0 + $0x30] sm:$0xff]
        %v200 = vld [vmem:[%s0 + $0x38] sm:$0xff]
        %v201 = vld [vmem:[%s0 + $0x40] sm:$0xff]
        %v202 = vld [vmem:[%s0 + $0x48] sm:$0xff]
        %v203 = vld [vmem:[%s0 + $0x50] sm:$0xff]
        %v204 = vld [vmem:[%s0 + $0x58] sm:$0xff]
        %v205 = vld [vmem:[%s0 + $0x60] sm:$0xff]
        %v206 = vld [vmem:[%s0 + $0x68] sm:$0xff]
        %v207 = vld [vmem:[%s0 + $0x70] sm:$0xff]
        %v208 = vld [vmem:[%s0 + $0x78] sm:$0xff]
        %v209 = vld [vmem:[%s0 + $0x80] sm:$0xff]
        %v210 = vld [vmem:[%s0 + $0x88] sm:$0xff]
        %v211 = vld [vmem:[%s0 + $0x90] sm:$0xff]
        %v212 = vld [vmem:[%s0 + $0x98] sm:$0xff]
        %v213 = vld [vmem:[%s0 + $0xa0] sm:$0xff]
        %v214 = vld [vmem:[%s0 + $0xa8] sm:$0xff]
        %v215 = vld [vmem:[%s0 + $0xb0] sm:$0xff]
        %v216 = vld [vmem:[%s0 + $0xb8] sm:$0xff]
        %v217 = vld [vmem:[%s0 + $0xc0] sm:$0xff]
        %v218 = vld [vmem:[%s0 + $0xc8] sm:$0xff]
        %v219 = vld [vmem:[%s0 + $0xd0] sm:$0xff]
        %v220 = vld [vmem:[%s0 + $0xd8] sm:$0xff]
        %v221 = vld [vmem:[%s0 + $0xe0] sm:$0xff]
        %v222 = vld [vmem:[%s0 + $0xe8] sm:$0xff]
        %v223 = vld [vmem:[%s0 + $0xf0] sm:$0xff]
        %v224 = vld [vmem:[%s0 + $0xf8] sm:$0xff]
        %v225 = vld [vmem:[%s0 + $0x100] sm:$0xff]
        %v226 = vld [vmem:[%s0 + $0x108] sm:$0xff]
        %v227 = vld [vmem:[%s0 + $0x110] sm:$0xff]
        %v228 = vld [vmem:[%s0 + $0x118] sm:$0xff]
        %v229 = vld [vmem:[%s0 + $0x120] sm:$0xff]
        %v230 = vld [vmem:[%s0 + $0x128] sm:$0xff]
        %v231 = vld [vmem:[%s0 + $0x130] sm:$0xff]
        %v232 = vld [vmem:[%s0 + $0x138] sm:$0xff]
        %v233 = vld [vmem:[%s0 + $0x140] sm:$0xff]
        %v234 = vld [vmem:[%s0 + $0x148] sm:$0xff]
        %v235 = vld [vmem:[%s0 + $0x150] sm:$0xff]
        %v236 = vld [vmem:[%s1] sm:$0xff]
        %v237 = vld [vmem:[%s1 + $0x8] sm:$0xff]
        %v238 = vld [vmem:[%s1 + $0x10] sm:$0xff]
        %v239 = vld [vmem:[%s1 + $0x18] sm:$0xff]
        %v240 = vld [vmem:[%s1 + $0x20] sm:$0xff]
        %v241 = vld [vmem:[%s1 + $0x28] sm:$0xff]
        %v242 = vld [vmem:[%s1 + $0x30] sm:$0xff]
        %v243 = vld [vmem:[%s1 + $0x38] sm:$0xff]
        %v244 = vld [vmem:[%s1 + $0x40] sm:$0xff]
        %v245 = vld [vmem:[%s1 + $0x48] sm:$0xff]
        %v246 = vld [vmem:[%s1 + $0x50] sm:$0xff]
        %v247 = vld [vmem:[%s1 + $0x58] sm:$0xff]
        %v248 = vld [vmem:[%s1 + $0x60] sm:$0xff]
        %v249 = vld [vmem:[%s1 + $0x68] sm:$0xff]
        %v250 = vld [vmem:[%s1 + $0x70] sm:$0xff]
        %v251 = vld [vmem:[%s1 + $0x78] sm:$0xff]
        %v252 = vld [vmem:[%s1 + $0x80] sm:$0xff]
        %v253 = vld [vmem:[%s1 + $0x88] sm:$0xff]
        %v254 = vld [vmem:[%s1 + $0x90] sm:$0xff]
        %v255 = vld [vmem:[%s1 + $0x98] sm:$0xff]
        %v256 = vld [vmem:[%s1 + $0xa0] sm:$0xff]
        %v257 = vld [vmem:[%s1 + $0xa8] sm:$0xff]
        %v258 = vld [vmem:[%s1 + $0xb0] sm:$0xff]
        %v259 = vld [vmem:[%s1 + $0xb8] sm:$0xff]
        %v260 = vld [vmem:[%s1 + $0xc0] sm:$0xff]
        %v261 = vld [vmem:[%s1 + $0xc8] sm:$0xff]
        %v262 = vld [vmem:[%s1 + $0xd0] sm:$0xff]
        %v263 = vld [vmem:[%s1 + $0xd8] sm:$0xff]
        %v264 = vld [vmem:[%s1 + $0xe0] sm:$0xff]
        %v265 = vld [vmem:[%s1 + $0xe8] sm:$0xff]
        %v266 = vld [vmem:[%s1 + $0xf0] sm:$0xff]
        %v267 = vld [vmem:[%s1 + $0xf8] sm:$0xff]
        %v268 = vld [vmem:[%s1 + $0x100] sm:$0xff]
        %v269 = vld [vmem:[%s1 + $0x108] sm:$0xff]
        %v270 = vld [vmem:[%s1 + $0x110] sm:$0xff]
        %v271 = vld [vmem:[%s1 + $0x118] sm:$0xff]
        %v272 = vld [vmem:[%s1 + $0x120] sm:$0xff]
        %v273 = vld [vmem:[%s1 + $0x128] sm:$0xff]
        %v274 = vld [vmem:[%s1 + $0x130] sm:$0xff]
        %v275 = vld [vmem:[%s1 + $0x138] sm:$0xff]
        %v276 = vld [vmem:[%s1 + $0x140] sm:$0xff]
        %v277 = vld [vmem:[%s1 + $0x148] sm:$0xff]
        %v278 = vld [vmem:[%s1 + $0x150] sm:$0xff]
        %v279 = vadd.f32 %v193, %v236
        %v280 = vadd.f32 %v194, %v237
        %v281 = vadd.f32 %v195, %v238
        %v282 = vadd.f32 %v196, %v239
        %v283 = vadd.f32 %v197, %v240
        %v284 = vadd.f32 %v198, %v241
        %v285 = vadd.f32 %v199, %v242
        %v286 = vadd.f32 %v200, %v243
        %v287 = vadd.f32 %v201, %v244
        %v288 = vadd.f32 %v202, %v245
        %v289 = vadd.f32 %v203, %v246
        %v290 = vadd.f32 %v204, %v247
        %v291 = vadd.f32 %v205, %v248
        %v292 = vadd.f32 %v206, %v249
        %v293 = vadd.f32 %v207, %v250
        %v294 = vadd.f32 %v208, %v251
        %v295 = vadd.f32 %v209, %v252
        %v296 = vadd.f32 %v210, %v253
        %v297 = vadd.f32 %v211, %v254
        %v298 = vadd.f32 %v212, %v255
        %v299 = vadd.f32 %v213, %v256
        %v300 = vadd.f32 %v214, %v257
        %v301 = vadd.f32 %v215, %v258
        %v302 = vadd.f32 %v216, %v259
        %v303 = vadd.f32 %v217, %v260
        %v304 = vadd.f32 %v218, %v261
        %v305 = vadd.f32 %v219, %v262
        %v306 = vadd.f32 %v220, %v263
        %v307 = vadd.f32 %v221, %v264
        %v308 = vadd.f32 %v222, %v265
        %v309 = vadd.f32 %v223, %v266
        %v310 = vadd.f32 %v224, %v267
        %v311 = vadd.f32 %v225, %v268
        %v312 = vadd.f32 %v226, %v269
        %v313 = vadd.f32 %v227, %v270
        %v314 = vadd.f32 %v228, %v271
        %v315 = vadd.f32 %v229, %v272
        %v316 = vadd.f32 %v230, %v273
        %v317 = vadd.f32 %v231, %v274
        %v318 = vadd.f32 %v232, %v275
        %v319 = vadd.f32 %v233, %v276
        %v320 = vadd.f32 %v234, %v277
        %v321 = vadd.f32 %v235, %v278
        %v322 = vpack.c.bf16 %v280, %v279
        %v323 = vpack.c.bf16 %v282, %v281
        %v324 = vpack.c.bf16 %v284, %v283
        %v325 = vpack.c.bf16 %v286, %v285
        %v326 = vpack.c.bf16 %v288, %v287
        %v327 = vpack.c.bf16 %v290, %v289
        %v328 = vpack.c.bf16 %v292, %v291
        %v329 = vpack.c.bf16 %v294, %v293
        %v330 = vpack.c.bf16 %v296, %v295
        %v331 = vpack.c.bf16 %v298, %v297
        %v332 = vpack.c.bf16 %v300, %v299
        %v333 = vpack.c.bf16 %v302, %v301
        %v334 = vpack.c.bf16 %v304, %v303
        %v335 = vpack.c.bf16 %v306, %v305
        %v336 = vpack.c.bf16 %v308, %v307
        %v337 = vpack.c.bf16 %v310, %v309
        %v338 = vpack.c.bf16 %v312, %v311
        %v339 = vpack.c.bf16 %v314, %v313
        %v340 = vpack.c.bf16 %v316, %v315
        %v341 = vpack.c.bf16 %v318, %v317
        %v342 = vpack.c.bf16 %v320, %v319
        %v343 = vpack.c.bf16 %v321, %v321
        %v344 = vld [vmem:[%s163] sm:$0xff]
        %v345 = vld [vmem:[%s163 + $0x8] sm:$0xf]
        %v346 = vld [vmem:[%s163 + $0xc] sm:$0xff]
        %v347 = vld [vmem:[%s163 + $0x14] sm:$0xf]
        %v348 = vld [vmem:[%s163 + $0x18] sm:$0xff]
        %v349 = vld [vmem:[%s163 + $0x20] sm:$0xf]
        %v350 = vld [vmem:[%s163 + $0x24] sm:$0xff]
        %v351 = vld [vmem:[%s163 + $0x2c] sm:$0xf]
        %v352 = vld [vmem:[%s163 + $0x30] sm:$0xff]
        %v353 = vld [vmem:[%s163 + $0x38] sm:$0xf]
        %v354 = vld [vmem:[%s163 + $0x3c] sm:$0xff]
        %v355 = vld [vmem:[%s163 + $0x44] sm:$0xf]
        %v356 = vld [vmem:[%s163 + $0x48] sm:$0xff]
        %v357 = vld [vmem:[%s163 + $0x50] sm:$0xf]
        %v358 = vld [vmem:[%s163 + $0x54] sm:$0xff]
        %v359 = vld [vmem:[%s163 + $0x5c] sm:$0xf]
        %v360 = vld [vmem:[%s163 + $0x60] sm:$0xff]
        %v361 = vld [vmem:[%s163 + $0x68] sm:$0xf]
        %v362 = vld [vmem:[%s163 + $0x6c] sm:$0xff]
        %v363 = vld [vmem:[%s163 + $0x74] sm:$0xf]
        %v364 = vld [vmem:[%s163 + $0x78] sm:$0xff]
        %v365 = vld [vmem:[%s163 + $0x80] sm:$0xf]
        %v366 = vld [vmem:[%s163 + $0x84] sm:$0xff]
        %v367 = vld [vmem:[%s163 + $0x8c] sm:$0xf]
        %v368 = vld [vmem:[%s163 + $0x90] sm:$0xff]
        %v369 = vld [vmem:[%s163 + $0x98] sm:$0xf]
        %v370 = vld [vmem:[%s163 + $0x9c] sm:$0xff]
        %v371 = vld [vmem:[%s163 + $0xa4] sm:$0xf]
        %v372 = vld [vmem:[%s163 + $0xa8] sm:$0xff]
        %v373 = vld [vmem:[%s163 + $0xb0] sm:$0xf]
        %v374 = vld [vmem:[%s163 + $0xb4] sm:$0xff]
        %v375 = vld [vmem:[%s163 + $0xbc] sm:$0xf]
        %v376 = vld [vmem:[%s163 + $0xc0] sm:$0xff]
        %v377 = vld [vmem:[%s163 + $0xc8] sm:$0xf]
        %v378 = vld [vmem:[%s163 + $0xcc] sm:$0xff]
        %v379 = vld [vmem:[%s163 + $0xd4] sm:$0xf]
        %v380 = vld [vmem:[%s163 + $0xd8] sm:$0xff]
        %v381 = vld [vmem:[%s163 + $0xe0] sm:$0xf]
        %v382 = vld [vmem:[%s163 + $0xe4] sm:$0xff]
        %v383 = vld [vmem:[%s163 + $0xec] sm:$0xf]
        %v384 = vld [vmem:[%s163 + $0xf0] sm:$0xff]
        %v385 = vld [vmem:[%s163 + $0xf8] sm:$0xf]
        %v386 = vld [vmem:[%s163 + $0xfc] sm:$0xff]
        %v387 = vld [vmem:[%s163 + $0x104] sm:$0xf]
        %v388 = vld [vmem:[%s163 + $0x108] sm:$0xff]
        %v389 = vld [vmem:[%s163 + $0x110] sm:$0xf]
        %v390 = vld [vmem:[%s163 + $0x114] sm:$0xff]
        %v391 = vld [vmem:[%s163 + $0x11c] sm:$0xf]
        %v392 = vld [vmem:[%s163 + $0x120] sm:$0xff]
        %v393 = vld [vmem:[%s163 + $0x128] sm:$0xf]
        %v394 = vld [vmem:[%s163 + $0x12c] sm:$0xff]
        %v395 = vld [vmem:[%s163 + $0x134] sm:$0xf]
        %v396 = vld [vmem:[%s163 + $0x138] sm:$0xff]
        %v397 = vld [vmem:[%s163 + $0x140] sm:$0xf]
        %v398 = vld [vmem:[%s163 + $0x144] sm:$0xff]
        %v399 = vld [vmem:[%s163 + $0x14c] sm:$0xf]
        %v400 = vld [vmem:[%s163 + $0x150] sm:$0xff]
        %v401 = vld [vmem:[%s163 + $0x158] sm:$0xf]
        %v402 = vld [vmem:[%s163 + $0x15c] sm:$0xff]
        %v403 = vld [vmem:[%s163 + $0x164] sm:$0xf]
        %v404 = vld [vmem:[%s163 + $0x168] sm:$0xff]
        %v405 = vld [vmem:[%s163 + $0x170] sm:$0xf]
        %v406 = vld [vmem:[%s163 + $0x174] sm:$0xff]
        %v407 = vld [vmem:[%s163 + $0x17c] sm:$0xf]
        %v408 = vld [vmem:[%s163 + $0x180] sm:$0xff]
        %v409 = vld [vmem:[%s163 + $0x188] sm:$0xf]
        %v410 = vld [vmem:[%s163 + $0x18c] sm:$0xff]
        %v411 = vld [vmem:[%s163 + $0x194] sm:$0xf]
        %v412 = vld [vmem:[%s163 + $0x198] sm:$0xff]
        %v413 = vld [vmem:[%s163 + $0x1a0] sm:$0xf]
        %v414 = vld [vmem:[%s163 + $0x1a4] sm:$0xff]
        %v415 = vld [vmem:[%s163 + $0x1ac] sm:$0xf]
        %v416 = vld [vmem:[%s163 + $0x1b0] sm:$0xff]
        %v417 = vld [vmem:[%s163 + $0x1b8] sm:$0xf]
        %v418 = vld [vmem:[%s163 + $0x1bc] sm:$0xff]
        %v419 = vld [vmem:[%s163 + $0x1c4] sm:$0xf]
        %v420 = vld [vmem:[%s163 + $0x1c8] sm:$0xff]
        %v421 = vld [vmem:[%s163 + $0x1d0] sm:$0xf]
        %v422 = vld [vmem:[%s163 + $0x1d4] sm:$0xff]
        %v423 = vld [vmem:[%s163 + $0x1dc] sm:$0xf]
        %v424 = vld [vmem:[%s163 + $0x1e0] sm:$0xff]
        %v425 = vld [vmem:[%s163 + $0x1e8] sm:$0xf]
        %v426 = vld [vmem:[%s163 + $0x1ec] sm:$0xff]
        %v427 = vld [vmem:[%s163 + $0x1f4] sm:$0xf]
        %v428 = vld [vmem:[%s163 + $0x1f8] sm:$0xff]
        %v429 = vld [vmem:[%s163 + $0x200] sm:$0xf]
        %v430 = vld [vmem:[%s163 + $0x204] sm:$0xff]
        %v431 = vld [vmem:[%s163 + $0x20c] sm:$0xf]
        %v432 = vld [vmem:[%s163 + $0x210] sm:$0xff]
        %v433 = vld [vmem:[%s163 + $0x218] sm:$0xf]
        %v434 = vld [vmem:[%s163 + $0x21c] sm:$0xff]
        %v435 = vld [vmem:[%s163 + $0x224] sm:$0xf]
        %v436 = vld [vmem:[%s163 + $0x228] sm:$0xff]
        %v437 = vld [vmem:[%s163 + $0x230] sm:$0xf]
        %v438 = vld [vmem:[%s163 + $0x234] sm:$0xff]
        %v439 = vld [vmem:[%s163 + $0x23c] sm:$0xf]
        %v440 = vld [vmem:[%s163 + $0x240] sm:$0xff]
        %v441 = vld [vmem:[%s163 + $0x248] sm:$0xf]
        %v442 = vld [vmem:[%s163 + $0x24c] sm:$0xff]
        %v443 = vld [vmem:[%s163 + $0x254] sm:$0xf]
        %v444 = vld [vmem:[%s163 + $0x258] sm:$0xff]
        %v445 = vld [vmem:[%s163 + $0x260] sm:$0xf]
        %v446 = vld [vmem:[%s163 + $0x264] sm:$0xff]
        %v447 = vld [vmem:[%s163 + $0x26c] sm:$0xf]
        %v448 = vld [vmem:[%s163 + $0x270] sm:$0xff]
        %v449 = vld [vmem:[%s163 + $0x278] sm:$0xf]
        %v450 = vld [vmem:[%s163 + $0x27c] sm:$0xff]
        %v451 = vld [vmem:[%s163 + $0x284] sm:$0xf]
        %v452 = vld [vmem:[%s163 + $0x288] sm:$0xff]
        %v453 = vld [vmem:[%s163 + $0x290] sm:$0xf]
        %v454 = vld [vmem:[%s163 + $0x294] sm:$0xff]
        %v455 = vld [vmem:[%s163 + $0x29c] sm:$0xf]
        %v456 = vld [vmem:[%s163 + $0x2a0] sm:$0xff]
        %v457 = vld [vmem:[%s163 + $0x2a8] sm:$0xf]
        %v458 = vld [vmem:[%s163 + $0x2ac] sm:$0xff]
        %v459 = vld [vmem:[%s163 + $0x2b4] sm:$0xf]
        %v460 = vld [vmem:[%s163 + $0x2b8] sm:$0xff]
        %v461 = vld [vmem:[%s163 + $0x2c0] sm:$0xf]
        %v462 = vld [vmem:[%s163 + $0x2c4] sm:$0xff]
        %v463 = vld [vmem:[%s163 + $0x2cc] sm:$0xf]
        %v464 = vld [vmem:[%s163 + $0x2d0] sm:$0xff]
        %v465 = vld [vmem:[%s163 + $0x2d8] sm:$0xf]
        %v466 = vld [vmem:[%s163 + $0x2dc] sm:$0xff]
        %v467 = vld [vmem:[%s163 + $0x2e4] sm:$0xf]
        %v468 = vld [vmem:[%s163 + $0x2e8] sm:$0xff]
        %v469 = vld [vmem:[%s163 + $0x2f0] sm:$0xf]
        %v470 = vld [vmem:[%s163 + $0x2f4] sm:$0xff]
        %v471 = vld [vmem:[%s163 + $0x2fc] sm:$0xf]
        %v472 = vld [vmem:[%s163 + $0x300] sm:$0xff]
        %v473 = vld [vmem:[%s163 + $0x308] sm:$0xf]
        %v474 = vld [vmem:[%s163 + $0x30c] sm:$0xff]
        %v475 = vld [vmem:[%s163 + $0x314] sm:$0xf]
        %v476 = vld [vmem:[%s163 + $0x318] sm:$0xff]
        %v477 = vld [vmem:[%s163 + $0x320] sm:$0xf]
        %v478 = vld [vmem:[%s163 + $0x324] sm:$0xff]
        %v479 = vld [vmem:[%s163 + $0x32c] sm:$0xf]
        %v480 = vld [vmem:[%s163 + $0x330] sm:$0xff]
        %v481 = vld [vmem:[%s163 + $0x338] sm:$0xf]
        %v482 = vld [vmem:[%s163 + $0x33c] sm:$0xff]
        %v483 = vld [vmem:[%s163 + $0x344] sm:$0xf]
        %v484 = vld [vmem:[%s163 + $0x348] sm:$0xff]
        %v485 = vld [vmem:[%s163 + $0x350] sm:$0xf]
        %v486 = vld [vmem:[%s163 + $0x354] sm:$0xff]
        %v487 = vld [vmem:[%s163 + $0x35c] sm:$0xf]
        %v488 = vld [vmem:[%s163 + $0x360] sm:$0xff]
        %v489 = vld [vmem:[%s163 + $0x368] sm:$0xf]
        %v490 = vld [vmem:[%s163 + $0x36c] sm:$0xff]
        %v491 = vld [vmem:[%s163 + $0x374] sm:$0xf]
        %v492 = vld [vmem:[%s163 + $0x378] sm:$0xff]
        %v493 = vld [vmem:[%s163 + $0x380] sm:$0xf]
        %v494 = vld [vmem:[%s163 + $0x384] sm:$0xff]
        %v495 = vld [vmem:[%s163 + $0x38c] sm:$0xf]
        %v496 = vld [vmem:[%s163 + $0x390] sm:$0xff]
        %v497 = vld [vmem:[%s163 + $0x398] sm:$0xf]
        %v498 = vld [vmem:[%s163 + $0x39c] sm:$0xff]
        %v499 = vld [vmem:[%s163 + $0x3a4] sm:$0xf]
        %v500 = vld [vmem:[%s163 + $0x3a8] sm:$0xff]
        %v501 = vld [vmem:[%s163 + $0x3b0] sm:$0xf]
        %v502 = vld [vmem:[%s163 + $0x3b4] sm:$0xff]
        %v503 = vld [vmem:[%s163 + $0x3bc] sm:$0xf]
        %v504 = vld [vmem:[%s163 + $0x3c0] sm:$0xff]
        %v505 = vld [vmem:[%s163 + $0x3c8] sm:$0xf]
        %v506 = vld [vmem:[%s163 + $0x3cc] sm:$0xff]
        %v507 = vld [vmem:[%s163 + $0x3d4] sm:$0xf]
        %v508 = vld [vmem:[%s163 + $0x3d8] sm:$0xff]
        %v509 = vld [vmem:[%s163 + $0x3e0] sm:$0xf]
        %v510 = vld [vmem:[%s163 + $0x3e4] sm:$0xff]
        %v511 = vld [vmem:[%s163 + $0x3ec] sm:$0xf]
        %v512 = vld [vmem:[%s163 + $0x3f0] sm:$0xff]
        %v513 = vld [vmem:[%s163 + $0x3f8] sm:$0xf]
        %v514 = vld [vmem:[%s163 + $0x3fc] sm:$0xff]
        %v515 = vld [vmem:[%s163 + $0x404] sm:$0xf]
        %v516 = vld [vmem:[%s163 + $0x408] sm:$0xff]
        %v517 = vld [vmem:[%s163 + $0x410] sm:$0xf]
        %v518 = vld [vmem:[%s163 + $0x414] sm:$0xff]
        %v519 = vld [vmem:[%s163 + $0x41c] sm:$0xf]
        %v520 = vld [vmem:[%s163 + $0x420] sm:$0xff]
        %v521 = vld [vmem:[%s163 + $0x428] sm:$0xf]
        %v522 = vld [vmem:[%s163 + $0x42c] sm:$0xff]
        %v523 = vld [vmem:[%s163 + $0x434] sm:$0xf]
        %v524 = vld [vmem:[%s163 + $0x438] sm:$0xff]
        %v525 = vld [vmem:[%s163 + $0x440] sm:$0xf]
        %v526 = vld [vmem:[%s163 + $0x444] sm:$0xff]
        %v527 = vld [vmem:[%s163 + $0x44c] sm:$0xf]
        %v528 = vld [vmem:[%s163 + $0x450] sm:$0xff]
        %v529 = vld [vmem:[%s163 + $0x458] sm:$0xf]
        %v530 = vld [vmem:[%s163 + $0x45c] sm:$0xff]
        %v531 = vld [vmem:[%s163 + $0x464] sm:$0xf]
        %v532 = vld [vmem:[%s163 + $0x468] sm:$0xff]
        %v533 = vld [vmem:[%s163 + $0x470] sm:$0xf]
        %v534 = vld [vmem:[%s163 + $0x474] sm:$0xff]
        %v535 = vld [vmem:[%s163 + $0x47c] sm:$0xf]
        %v536 = vld [vmem:[%s163 + $0x480] sm:$0xff]
        %v537 = vld [vmem:[%s163 + $0x488] sm:$0xf]
        %v538 = vld [vmem:[%s163 + $0x48c] sm:$0xff]
        %v539 = vld [vmem:[%s163 + $0x494] sm:$0xf]
        %v540 = vld [vmem:[%s163 + $0x498] sm:$0xff]
        %v541 = vld [vmem:[%s163 + $0x4a0] sm:$0xf]
        %v542 = vld [vmem:[%s163 + $0x4a4] sm:$0xff]
        %v543 = vld [vmem:[%s163 + $0x4ac] sm:$0xf]
        %v544 = vld [vmem:[%s163 + $0x4b0] sm:$0xff]
        %v545 = vld [vmem:[%s163 + $0x4b8] sm:$0xf]
        %v546 = vld [vmem:[%s163 + $0x4bc] sm:$0xff]
        %v547 = vld [vmem:[%s163 + $0x4c4] sm:$0xf]
        %v548 = vld [vmem:[%s163 + $0x4c8] sm:$0xff]
        %v549 = vld [vmem:[%s163 + $0x4d0] sm:$0xf]
        %v550 = vld [vmem:[%s163 + $0x4d4] sm:$0xff]
        %v551 = vld [vmem:[%s163 + $0x4dc] sm:$0xf]
        %v552 = vld [vmem:[%s163 + $0x4e0] sm:$0xff]
        %v553 = vld [vmem:[%s163 + $0x4e8] sm:$0xf]
        %v554 = vld [vmem:[%s163 + $0x4ec] sm:$0xff]
        %v555 = vld [vmem:[%s163 + $0x4f4] sm:$0xf]
        %v556 = vld [vmem:[%s163 + $0x4f8] sm:$0xff]
        %v557 = vld [vmem:[%s163 + $0x500] sm:$0xf]
        %v558 = vld [vmem:[%s163 + $0x504] sm:$0xff]
        %v559 = vld [vmem:[%s163 + $0x50c] sm:$0xf]
        %v560 = vld [vmem:[%s163 + $0x510] sm:$0xff]
        %v561 = vld [vmem:[%s163 + $0x518] sm:$0xf]
        %v562 = vld [vmem:[%s163 + $0x51c] sm:$0xff]
        %v563 = vld [vmem:[%s163 + $0x524] sm:$0xf]
        %v564 = vld [vmem:[%s163 + $0x528] sm:$0xff]
        %v565 = vld [vmem:[%s163 + $0x530] sm:$0xf]
        %v566 = vld [vmem:[%s163 + $0x534] sm:$0xff]
        %v567 = vld [vmem:[%s163 + $0x53c] sm:$0xf]
        %v568 = vld [vmem:[%s163 + $0x540] sm:$0xff]
        %v569 = vld [vmem:[%s163 + $0x548] sm:$0xf]
        %v570 = vld [vmem:[%s163 + $0x54c] sm:$0xff]
        %v571 = vld [vmem:[%s163 + $0x554] sm:$0xf]
        %v572 = vld [vmem:[%s163 + $0x558] sm:$0xff]
        %v573 = vld [vmem:[%s163 + $0x560] sm:$0xf]
        %v574 = vld [vmem:[%s163 + $0x564] sm:$0xff]
        %v575 = vld [vmem:[%s163 + $0x56c] sm:$0xf]
        %v576 = vld [vmem:[%s163 + $0x570] sm:$0xff]
        %v577 = vld [vmem:[%s163 + $0x578] sm:$0xf]
        %v578 = vld [vmem:[%s163 + $0x57c] sm:$0xff]
        %v579 = vld [vmem:[%s163 + $0x584] sm:$0xf]
        %v580 = vld [vmem:[%s163 + $0x588] sm:$0xff]
        %v581 = vld [vmem:[%s163 + $0x590] sm:$0xf]
        %v582 = vld [vmem:[%s163 + $0x594] sm:$0xff]
        %v583 = vld [vmem:[%s163 + $0x59c] sm:$0xf]
        %v584 = vld [vmem:[%s163 + $0x5a0] sm:$0xff]
        %v585 = vld [vmem:[%s163 + $0x5a8] sm:$0xf]
        %v586 = vld [vmem:[%s163 + $0x5ac] sm:$0xff]
        %v587 = vld [vmem:[%s163 + $0x5b4] sm:$0xf]
        %v588 = vld [vmem:[%s163 + $0x5b8] sm:$0xff]
        %v589 = vld [vmem:[%s163 + $0x5c0] sm:$0xf]
        %v590 = vld [vmem:[%s163 + $0x5c4] sm:$0xff]
        %v591 = vld [vmem:[%s163 + $0x5cc] sm:$0xf]
        %v592 = vld [vmem:[%s163 + $0x5d0] sm:$0xff]
        %v593 = vld [vmem:[%s163 + $0x5d8] sm:$0xf]
        %v594 = vld [vmem:[%s163 + $0x5dc] sm:$0xff]
        %v595 = vld [vmem:[%s163 + $0x5e4] sm:$0xf]
        %v596 = vld [vmem:[%s163 + $0x5e8] sm:$0xff]
        %v597 = vld [vmem:[%s163 + $0x5f0] sm:$0xf]
        %v598 = vld [vmem:[%s163 + $0x5f4] sm:$0xff]
        %v599 = vld [vmem:[%s163 + $0x5fc] sm:$0xf]
        %v600 = vld [vmem:[%s163 + $0x600] sm:$0xff]
        %v601 = vld [vmem:[%s163 + $0x608] sm:$0xf]
        %v860 = vunpack.c.l.b16 %v344
        %v861 = vunpack.c.h.b16 %v344
        %v862 = vunpack.c.l.b16 %v345
        %v863 = vunpack.c.l.b16 %v346
        %v864 = vunpack.c.h.b16 %v346
        %v865 = vunpack.c.l.b16 %v347
        %v866 = vunpack.c.l.b16 %v348
        %v867 = vunpack.c.h.b16 %v348
        %v868 = vunpack.c.l.b16 %v349
        %v869 = vunpack.c.l.b16 %v350
        %v870 = vunpack.c.h.b16 %v350
        %v871 = vunpack.c.l.b16 %v351
        %v872 = vunpack.c.l.b16 %v352
        %v873 = vunpack.c.h.b16 %v352
        %v874 = vunpack.c.l.b16 %v353
        %v875 = vunpack.c.l.b16 %v354
        %v876 = vunpack.c.h.b16 %v354
        %v877 = vunpack.c.l.b16 %v355
        %v878 = vunpack.c.l.b16 %v356
        %v879 = vunpack.c.h.b16 %v356
        %v880 = vunpack.c.l.b16 %v357
        %v881 = vunpack.c.l.b16 %v358
        %v882 = vunpack.c.h.b16 %v358
        %v883 = vunpack.c.l.b16 %v359
        %v884 = vunpack.c.l.b16 %v360
        %v885 = vunpack.c.h.b16 %v360
        %v886 = vunpack.c.l.b16 %v361
        %v887 = vunpack.c.l.b16 %v362
        %v888 = vunpack.c.h.b16 %v362
        %v889 = vunpack.c.l.b16 %v363
        %v890 = vunpack.c.l.b16 %v364
        %v891 = vunpack.c.h.b16 %v364
        %v892 = vunpack.c.l.b16 %v365
        %v893 = vunpack.c.l.b16 %v366
        %v894 = vunpack.c.h.b16 %v366
        %v895 = vunpack.c.l.b16 %v367
        %v896 = vunpack.c.l.b16 %v368
        %v897 = vunpack.c.h.b16 %v368
        %v898 = vunpack.c.l.b16 %v369
        %v899 = vunpack.c.l.b16 %v370
        %v900 = vunpack.c.h.b16 %v370
        %v901 = vunpack.c.l.b16 %v371
        %v902 = vunpack.c.l.b16 %v372
        %v903 = vunpack.c.h.b16 %v372
        %v904 = vunpack.c.l.b16 %v373
        %v905 = vunpack.c.l.b16 %v374
        %v906 = vunpack.c.h.b16 %v374
        %v907 = vunpack.c.l.b16 %v375
        %v908 = vunpack.c.l.b16 %v376
        %v909 = vunpack.c.h.b16 %v376
        %v910 = vunpack.c.l.b16 %v377
        %v911 = vunpack.c.l.b16 %v378
        %v912 = vunpack.c.h.b16 %v378
        %v913 = vunpack.c.l.b16 %v379
        %v914 = vunpack.c.l.b16 %v380
        %v915 = vunpack.c.h.b16 %v380
        %v916 = vunpack.c.l.b16 %v381
        %v917 = vunpack.c.l.b16 %v382
        %v918 = vunpack.c.h.b16 %v382
        %v919 = vunpack.c.l.b16 %v383
        %v920 = vunpack.c.l.b16 %v384
        %v921 = vunpack.c.h.b16 %v384
        %v922 = vunpack.c.l.b16 %v385
        %v923 = vunpack.c.l.b16 %v386
        %v924 = vunpack.c.h.b16 %v386
        %v925 = vunpack.c.l.b16 %v387
        %v926 = vunpack.c.l.b16 %v388
        %v927 = vunpack.c.h.b16 %v388
        %v928 = vunpack.c.l.b16 %v389
        %v929 = vunpack.c.l.b16 %v390
        %v930 = vunpack.c.h.b16 %v390
        %v931 = vunpack.c.l.b16 %v391
        %v932 = vunpack.c.l.b16 %v392
        %v933 = vunpack.c.h.b16 %v392
        %v934 = vunpack.c.l.b16 %v393
        %v935 = vunpack.c.l.b16 %v394
        %v936 = vunpack.c.h.b16 %v394
        %v937 = vunpack.c.l.b16 %v395
        %v938 = vunpack.c.l.b16 %v396
        %v939 = vunpack.c.h.b16 %v396
        %v940 = vunpack.c.l.b16 %v397
        %v941 = vunpack.c.l.b16 %v398
        %v942 = vunpack.c.h.b16 %v398
        %v943 = vunpack.c.l.b16 %v399
        %v944 = vunpack.c.l.b16 %v400
        %v945 = vunpack.c.h.b16 %v400
        %v946 = vunpack.c.l.b16 %v401
        %v947 = vunpack.c.l.b16 %v402
        %v948 = vunpack.c.h.b16 %v402
        %v949 = vunpack.c.l.b16 %v403
        %v950 = vunpack.c.l.b16 %v404
        %v951 = vunpack.c.h.b16 %v404
        %v952 = vunpack.c.l.b16 %v405
        %v953 = vunpack.c.l.b16 %v406
        %v954 = vunpack.c.h.b16 %v406
        %v955 = vunpack.c.l.b16 %v407
        %v956 = vunpack.c.l.b16 %v408
        %v957 = vunpack.c.h.b16 %v408
        %v958 = vunpack.c.l.b16 %v409
        %v959 = vunpack.c.l.b16 %v410
        %v960 = vunpack.c.h.b16 %v410
        %v961 = vunpack.c.l.b16 %v411
        %v962 = vunpack.c.l.b16 %v412
        %v963 = vunpack.c.h.b16 %v412
        %v964 = vunpack.c.l.b16 %v413
        %v965 = vunpack.c.l.b16 %v414
        %v966 = vunpack.c.h.b16 %v414
        %v967 = vunpack.c.l.b16 %v415
        %v968 = vunpack.c.l.b16 %v416
        %v969 = vunpack.c.h.b16 %v416
        %v970 = vunpack.c.l.b16 %v417
        %v971 = vunpack.c.l.b16 %v418
        %v972 = vunpack.c.h.b16 %v418
        %v973 = vunpack.c.l.b16 %v419
        %v974 = vunpack.c.l.b16 %v420
        %v975 = vunpack.c.h.b16 %v420
        %v976 = vunpack.c.l.b16 %v421
        %v977 = vunpack.c.l.b16 %v422
        %v978 = vunpack.c.h.b16 %v422
        %v979 = vunpack.c.l.b16 %v423
        %v980 = vunpack.c.l.b16 %v424
        %v981 = vunpack.c.h.b16 %v424
        %v982 = vunpack.c.l.b16 %v425
        %v983 = vunpack.c.l.b16 %v426
        %v984 = vunpack.c.h.b16 %v426
        %v985 = vunpack.c.l.b16 %v427
        %v986 = vunpack.c.l.b16 %v428
        %v987 = vunpack.c.h.b16 %v428
        %v988 = vunpack.c.l.b16 %v429
        %v989 = vunpack.c.l.b16 %v430
        %v990 = vunpack.c.h.b16 %v430
        %v991 = vunpack.c.l.b16 %v431
        %v992 = vunpack.c.l.b16 %v432
        %v993 = vunpack.c.h.b16 %v432
        %v994 = vunpack.c.l.b16 %v433
        %v995 = vunpack.c.l.b16 %v434
        %v996 = vunpack.c.h.b16 %v434
        %v997 = vunpack.c.l.b16 %v435
        %v998 = vunpack.c.l.b16 %v436
        %v999 = vunpack.c.h.b16 %v436
        %v1000 = vunpack.c.l.b16 %v437
        %v1001 = vunpack.c.l.b16 %v438
        %v1002 = vunpack.c.h.b16 %v438
        %v1003 = vunpack.c.l.b16 %v439
        %v1004 = vunpack.c.l.b16 %v440
        %v1005 = vunpack.c.h.b16 %v440
        %v1006 = vunpack.c.l.b16 %v441
        %v1007 = vunpack.c.l.b16 %v442
        %v1008 = vunpack.c.h.b16 %v442
        %v1009 = vunpack.c.l.b16 %v443
        %v1010 = vunpack.c.l.b16 %v444
        %v1011 = vunpack.c.h.b16 %v444
        %v1012 = vunpack.c.l.b16 %v445
        %v1013 = vunpack.c.l.b16 %v446
        %v1014 = vunpack.c.h.b16 %v446
        %v1015 = vunpack.c.l.b16 %v447
        %v1016 = vunpack.c.l.b16 %v448
        %v1017 = vunpack.c.h.b16 %v448
        %v1018 = vunpack.c.l.b16 %v449
        %v1019 = vunpack.c.l.b16 %v450
        %v1020 = vunpack.c.h.b16 %v450
        %v1021 = vunpack.c.l.b16 %v451
        %v1022 = vunpack.c.l.b16 %v452
        %v1023 = vunpack.c.h.b16 %v452
        %v1024 = vunpack.c.l.b16 %v453
        %v1025 = vunpack.c.l.b16 %v454
        %v1026 = vunpack.c.h.b16 %v454
        %v1027 = vunpack.c.l.b16 %v455
        %v1028 = vunpack.c.l.b16 %v456
        %v1029 = vunpack.c.h.b16 %v456
        %v1030 = vunpack.c.l.b16 %v457
        %v1031 = vunpack.c.l.b16 %v458
        %v1032 = vunpack.c.h.b16 %v458
        %v1033 = vunpack.c.l.b16 %v459
        %v1034 = vunpack.c.l.b16 %v460
        %v1035 = vunpack.c.h.b16 %v460
        %v1036 = vunpack.c.l.b16 %v461
        %v1037 = vunpack.c.l.b16 %v462
        %v1038 = vunpack.c.h.b16 %v462
        %v1039 = vunpack.c.l.b16 %v463
        %v1040 = vunpack.c.l.b16 %v464
        %v1041 = vunpack.c.h.b16 %v464
        %v1042 = vunpack.c.l.b16 %v465
        %v1043 = vunpack.c.l.b16 %v466
        %v1044 = vunpack.c.h.b16 %v466
        %v1045 = vunpack.c.l.b16 %v467
        %v1046 = vunpack.c.l.b16 %v468
        %v1047 = vunpack.c.h.b16 %v468
        %v1048 = vunpack.c.l.b16 %v469
        %v1049 = vunpack.c.l.b16 %v470
        %v1050 = vunpack.c.h.b16 %v470
        %v1051 = vunpack.c.l.b16 %v471
        %v1052 = vunpack.c.l.b16 %v472
        %v1053 = vunpack.c.h.b16 %v472
        %v1054 = vunpack.c.l.b16 %v473
        %v1055 = vunpack.c.l.b16 %v474
        %v1056 = vunpack.c.h.b16 %v474
        %v1057 = vunpack.c.l.b16 %v475
        %v1058 = vunpack.c.l.b16 %v476
        %v1059 = vunpack.c.h.b16 %v476
        %v1060 = vunpack.c.l.b16 %v477
        %v1061 = vunpack.c.l.b16 %v478
        %v1062 = vunpack.c.h.b16 %v478
        %v1063 = vunpack.c.l.b16 %v479
        %v1064 = vunpack.c.l.b16 %v480
        %v1065 = vunpack.c.h.b16 %v480
        %v1066 = vunpack.c.l.b16 %v481
        %v1067 = vunpack.c.l.b16 %v482
        %v1068 = vunpack.c.h.b16 %v482
        %v1069 = vunpack.c.l.b16 %v483
        %v1070 = vunpack.c.l.b16 %v484
        %v1071 = vunpack.c.h.b16 %v484
        %v1072 = vunpack.c.l.b16 %v485
        %v1073 = vunpack.c.l.b16 %v486
        %v1074 = vunpack.c.h.b16 %v486
        %v1075 = vunpack.c.l.b16 %v487
        %v1076 = vunpack.c.l.b16 %v488
        %v1077 = vunpack.c.h.b16 %v488
        %v1078 = vunpack.c.l.b16 %v489
        %v1079 = vunpack.c.l.b16 %v490
        %v1080 = vunpack.c.h.b16 %v490
        %v1081 = vunpack.c.l.b16 %v491
        %v1082 = vunpack.c.l.b16 %v492
        %v1083 = vunpack.c.h.b16 %v492
        %v1084 = vunpack.c.l.b16 %v493
        %v1085 = vunpack.c.l.b16 %v494
        %v1086 = vunpack.c.h.b16 %v494
        %v1087 = vunpack.c.l.b16 %v495
        %v1088 = vunpack.c.l.b16 %v496
        %v1089 = vunpack.c.h.b16 %v496
        %v1090 = vunpack.c.l.b16 %v497
        %v1091 = vunpack.c.l.b16 %v498
        %v1092 = vunpack.c.h.b16 %v498
        %v1093 = vunpack.c.l.b16 %v499
        %v1094 = vunpack.c.l.b16 %v500
        %v1095 = vunpack.c.h.b16 %v500
        %v1096 = vunpack.c.l.b16 %v501
        %v1097 = vunpack.c.l.b16 %v502
        %v1098 = vunpack.c.h.b16 %v502
        %v1099 = vunpack.c.l.b16 %v503
        %v1100 = vunpack.c.l.b16 %v504
        %v1101 = vunpack.c.h.b16 %v504
        %v1102 = vunpack.c.l.b16 %v505
        %v1103 = vunpack.c.l.b16 %v506
        %v1104 = vunpack.c.h.b16 %v506
        %v1105 = vunpack.c.l.b16 %v507
        %v1106 = vunpack.c.l.b16 %v508
        %v1107 = vunpack.c.h.b16 %v508
        %v1108 = vunpack.c.l.b16 %v509
        %v1109 = vunpack.c.l.b16 %v510
        %v1110 = vunpack.c.h.b16 %v510
        %v1111 = vunpack.c.l.b16 %v511
        %v1112 = vunpack.c.l.b16 %v512
        %v1113 = vunpack.c.h.b16 %v512
        %v1114 = vunpack.c.l.b16 %v513
        %v1115 = vunpack.c.l.b16 %v514
        %v1116 = vunpack.c.h.b16 %v514
        %v1117 = vunpack.c.l.b16 %v515
        %v1118 = vunpack.c.l.b16 %v516
        %v1119 = vunpack.c.h.b16 %v516
        %v1120 = vunpack.c.l.b16 %v517
        %v1121 = vunpack.c.l.b16 %v518
        %v1122 = vunpack.c.h.b16 %v518
        %v1123 = vunpack.c.l.b16 %v519
        %v1124 = vunpack.c.l.b16 %v520
        %v1125 = vunpack.c.h.b16 %v520
        %v1126 = vunpack.c.l.b16 %v521
        %v1127 = vunpack.c.l.b16 %v522
        %v1128 = vunpack.c.h.b16 %v522
        %v1129 = vunpack.c.l.b16 %v523
        %v1130 = vunpack.c.l.b16 %v524
        %v1131 = vunpack.c.h.b16 %v524
        %v1132 = vunpack.c.l.b16 %v525
        %v1133 = vunpack.c.l.b16 %v526
        %v1134 = vunpack.c.h.b16 %v526
        %v1135 = vunpack.c.l.b16 %v527
        %v1136 = vunpack.c.l.b16 %v528
        %v1137 = vunpack.c.h.b16 %v528
        %v1138 = vunpack.c.l.b16 %v529
        %v1139 = vunpack.c.l.b16 %v530
        %v1140 = vunpack.c.h.b16 %v530
        %v1141 = vunpack.c.l.b16 %v531
        %v1142 = vunpack.c.l.b16 %v532
        %v1143 = vunpack.c.h.b16 %v532
        %v1144 = vunpack.c.l.b16 %v533
        %v1145 = vunpack.c.l.b16 %v534
        %v1146 = vunpack.c.h.b16 %v534
        %v1147 = vunpack.c.l.b16 %v535
        %v1148 = vunpack.c.l.b16 %v536
        %v1149 = vunpack.c.h.b16 %v536
        %v1150 = vunpack.c.l.b16 %v537
        %v1151 = vunpack.c.l.b16 %v538
        %v1152 = vunpack.c.h.b16 %v538
        %v1153 = vunpack.c.l.b16 %v539
        %v1154 = vunpack.c.l.b16 %v540
        %v1155 = vunpack.c.h.b16 %v540
        %v1156 = vunpack.c.l.b16 %v541
        %v1157 = vunpack.c.l.b16 %v542
        %v1158 = vunpack.c.h.b16 %v542
        %v1159 = vunpack.c.l.b16 %v543
        %v1160 = vunpack.c.l.b16 %v544
        %v1161 = vunpack.c.h.b16 %v544
        %v1162 = vunpack.c.l.b16 %v545
        %v1163 = vunpack.c.l.b16 %v546
        %v1164 = vunpack.c.h.b16 %v546
        %v1165 = vunpack.c.l.b16 %v547
        %v1166 = vunpack.c.l.b16 %v548
        %v1167 = vunpack.c.h.b16 %v548
        %v1168 = vunpack.c.l.b16 %v549
        %v1169 = vunpack.c.l.b16 %v550
        %v1170 = vunpack.c.h.b16 %v550
        %v1171 = vunpack.c.l.b16 %v551
        %v1172 = vunpack.c.l.b16 %v552
        %v1173 = vunpack.c.h.b16 %v552
        %v1174 = vunpack.c.l.b16 %v553
        %v1175 = vunpack.c.l.b16 %v554
        %v1176 = vunpack.c.h.b16 %v554
        %v1177 = vunpack.c.l.b16 %v555
        %v1178 = vunpack.c.l.b16 %v556
        %v1179 = vunpack.c.h.b16 %v556
        %v1180 = vunpack.c.l.b16 %v557
        %v1181 = vunpack.c.l.b16 %v558
        %v1182 = vunpack.c.h.b16 %v558
        %v1183 = vunpack.c.l.b16 %v559
        %v1184 = vunpack.c.l.b16 %v560
        %v1185 = vunpack.c.h.b16 %v560
        %v1186 = vunpack.c.l.b16 %v561
        %v1187 = vunpack.c.l.b16 %v562
        %v1188 = vunpack.c.h.b16 %v562
        %v1189 = vunpack.c.l.b16 %v563
        %v1190 = vunpack.c.l.b16 %v564
        %v1191 = vunpack.c.h.b16 %v564
        %v1192 = vunpack.c.l.b16 %v565
        %v1193 = vunpack.c.l.b16 %v566
        %v1194 = vunpack.c.h.b16 %v566
        %v1195 = vunpack.c.l.b16 %v567
        %v1196 = vunpack.c.l.b16 %v568
        %v1197 = vunpack.c.h.b16 %v568
        %v1198 = vunpack.c.l.b16 %v569
        %v1199 = vunpack.c.l.b16 %v570
        %v1200 = vunpack.c.h.b16 %v570
        %v1201 = vunpack.c.l.b16 %v571
        %v1202 = vunpack.c.l.b16 %v572
        %v1203 = vunpack.c.h.b16 %v572
        %v1204 = vunpack.c.l.b16 %v573
        %v1205 = vunpack.c.l.b16 %v574
        %v1206 = vunpack.c.h.b16 %v574
        %v1207 = vunpack.c.l.b16 %v575
        %v1208 = vunpack.c.l.b16 %v576
        %v1209 = vunpack.c.h.b16 %v576
        %v1210 = vunpack.c.l.b16 %v577
        %v1211 = vunpack.c.l.b16 %v578
        %v1212 = vunpack.c.h.b16 %v578
        %v1213 = vunpack.c.l.b16 %v579
        %v1214 = vunpack.c.l.b16 %v580
        %v1215 = vunpack.c.h.b16 %v580
        %v1216 = vunpack.c.l.b16 %v581
        %v1217 = vunpack.c.l.b16 %v582
        %v1218 = vunpack.c.h.b16 %v582
        %v1219 = vunpack.c.l.b16 %v583
        %v1220 = vunpack.c.l.b16 %v584
        %v1221 = vunpack.c.h.b16 %v584
        %v1222 = vunpack.c.l.b16 %v585
        %v1223 = vunpack.c.l.b16 %v586
        %v1224 = vunpack.c.h.b16 %v586
        %v1225 = vunpack.c.l.b16 %v587
        %v1226 = vunpack.c.l.b16 %v588
        %v1227 = vunpack.c.h.b16 %v588
        %v1228 = vunpack.c.l.b16 %v589
        %v1229 = vunpack.c.l.b16 %v590
        %v1230 = vunpack.c.h.b16 %v590
        %v1231 = vunpack.c.l.b16 %v591
        %v1232 = vunpack.c.l.b16 %v592
        %v1233 = vunpack.c.h.b16 %v592
        %v1234 = vunpack.c.l.b16 %v593
        %v1235 = vunpack.c.l.b16 %v594
        %v1236 = vunpack.c.h.b16 %v594
        %v1237 = vunpack.c.l.b16 %v595
        %v1238 = vunpack.c.l.b16 %v596
        %v1239 = vunpack.c.h.b16 %v596
        %v1240 = vunpack.c.l.b16 %v597
        %v1241 = vunpack.c.l.b16 %v598
        %v1242 = vunpack.c.h.b16 %v598
        %v1243 = vunpack.c.l.b16 %v599
        %v1244 = vunpack.c.l.b16 %v600
        %v1245 = vunpack.c.h.b16 %v600
        %v1246 = vunpack.c.l.b16 %v601
        %v1247 = vpack.c.b16 %v863, %v860
        %v1248 = vpack.c.b16 %v864, %v861
        %v1249 = vpack.c.b16 %v865, %v862
        %v1250 = vpack.c.b16 %v869, %v866
        %v1251 = vpack.c.b16 %v870, %v867
        %v1252 = vpack.c.b16 %v871, %v868
        %v1253 = vpack.c.b16 %v875, %v872
        %v1254 = vpack.c.b16 %v876, %v873
        %v1255 = vpack.c.b16 %v877, %v874
        %v1256 = vpack.c.b16 %v881, %v878
        %v1257 = vpack.c.b16 %v882, %v879
        %v1258 = vpack.c.b16 %v883, %v880
        %v1259 = vpack.c.b16 %v887, %v884
        %v1260 = vpack.c.b16 %v888, %v885
        %v1261 = vpack.c.b16 %v889, %v886
        %v1262 = vpack.c.b16 %v893, %v890
        %v1263 = vpack.c.b16 %v894, %v891
        %v1264 = vpack.c.b16 %v895, %v892
        %v1265 = vpack.c.b16 %v899, %v896
        %v1266 = vpack.c.b16 %v900, %v897
        %v1267 = vpack.c.b16 %v901, %v898
        %v1268 = vpack.c.b16 %v905, %v902
        %v1269 = vpack.c.b16 %v906, %v903
        %v1270 = vpack.c.b16 %v907, %v904
        %v1271 = vpack.c.b16 %v911, %v908
        %v1272 = vpack.c.b16 %v912, %v909
        %v1273 = vpack.c.b16 %v913, %v910
        %v1274 = vpack.c.b16 %v917, %v914
        %v1275 = vpack.c.b16 %v918, %v915
        %v1276 = vpack.c.b16 %v919, %v916
        %v1277 = vpack.c.b16 %v923, %v920
        %v1278 = vpack.c.b16 %v924, %v921
        %v1279 = vpack.c.b16 %v925, %v922
        %v1280 = vpack.c.b16 %v929, %v926
        %v1281 = vpack.c.b16 %v930, %v927
        %v1282 = vpack.c.b16 %v931, %v928
        %v1283 = vpack.c.b16 %v935, %v932
        %v1284 = vpack.c.b16 %v936, %v933
        %v1285 = vpack.c.b16 %v937, %v934
        %v1286 = vpack.c.b16 %v941, %v938
        %v1287 = vpack.c.b16 %v942, %v939
        %v1288 = vpack.c.b16 %v943, %v940
        %v1289 = vpack.c.b16 %v947, %v944
        %v1290 = vpack.c.b16 %v948, %v945
        %v1291 = vpack.c.b16 %v949, %v946
        %v1292 = vpack.c.b16 %v953, %v950
        %v1293 = vpack.c.b16 %v954, %v951
        %v1294 = vpack.c.b16 %v955, %v952
        %v1295 = vpack.c.b16 %v959, %v956
        %v1296 = vpack.c.b16 %v960, %v957
        %v1297 = vpack.c.b16 %v961, %v958
        %v1298 = vpack.c.b16 %v965, %v962
        %v1299 = vpack.c.b16 %v966, %v963
        %v1300 = vpack.c.b16 %v967, %v964
        %v1301 = vpack.c.b16 %v971, %v968
        %v1302 = vpack.c.b16 %v972, %v969
        %v1303 = vpack.c.b16 %v973, %v970
        %v1304 = vpack.c.b16 %v977, %v974
        %v1305 = vpack.c.b16 %v978, %v975
        %v1306 = vpack.c.b16 %v979, %v976
        %v1307 = vpack.c.b16 %v983, %v980
        %v1308 = vpack.c.b16 %v984, %v981
        %v1309 = vpack.c.b16 %v985, %v982
        %v1310 = vpack.c.b16 %v989, %v986
        %v1311 = vpack.c.b16 %v990, %v987
        %v1312 = vpack.c.b16 %v991, %v988
        %v1313 = vpack.c.b16 %v995, %v992
        %v1314 = vpack.c.b16 %v996, %v993
        %v1315 = vpack.c.b16 %v997, %v994
        %v1316 = vpack.c.b16 %v1001, %v998
        %v1317 = vpack.c.b16 %v1002, %v999
        %v1318 = vpack.c.b16 %v1003, %v1000
        %v1319 = vpack.c.b16 %v1007, %v1004
        %v1320 = vpack.c.b16 %v1008, %v1005
        %v1321 = vpack.c.b16 %v1009, %v1006
        %v1322 = vpack.c.b16 %v1013, %v1010
        %v1323 = vpack.c.b16 %v1014, %v1011
        %v1324 = vpack.c.b16 %v1015, %v1012
        %v1325 = vpack.c.b16 %v1019, %v1016
        %v1326 = vpack.c.b16 %v1020, %v1017
        %v1327 = vpack.c.b16 %v1021, %v1018
        %v1328 = vpack.c.b16 %v1025, %v1022
        %v1329 = vpack.c.b16 %v1026, %v1023
        %v1330 = vpack.c.b16 %v1027, %v1024
        %v1331 = vpack.c.b16 %v1031, %v1028
        %v1332 = vpack.c.b16 %v1032, %v1029
        %v1333 = vpack.c.b16 %v1033, %v1030
        %v1334 = vpack.c.b16 %v1037, %v1034
        %v1335 = vpack.c.b16 %v1038, %v1035
        %v1336 = vpack.c.b16 %v1039, %v1036
        %v1337 = vpack.c.b16 %v1043, %v1040
        %v1338 = vpack.c.b16 %v1044, %v1041
        %v1339 = vpack.c.b16 %v1045, %v1042
        %v1340 = vpack.c.b16 %v1049, %v1046
        %v1341 = vpack.c.b16 %v1050, %v1047
        %v1342 = vpack.c.b16 %v1051, %v1048
        %v1343 = vpack.c.b16 %v1055, %v1052
        %v1344 = vpack.c.b16 %v1056, %v1053
        %v1345 = vpack.c.b16 %v1057, %v1054
        %v1346 = vpack.c.b16 %v1061, %v1058
        %v1347 = vpack.c.b16 %v1062, %v1059
        %v1348 = vpack.c.b16 %v1063, %v1060
        %v1349 = vpack.c.b16 %v1067, %v1064
        %v1350 = vpack.c.b16 %v1068, %v1065
        %v1351 = vpack.c.b16 %v1069, %v1066
        %v1352 = vpack.c.b16 %v1073, %v1070
        %v1353 = vpack.c.b16 %v1074, %v1071
        %v1354 = vpack.c.b16 %v1075, %v1072
        %v1355 = vpack.c.b16 %v1079, %v1076
        %v1356 = vpack.c.b16 %v1080, %v1077
        %v1357 = vpack.c.b16 %v1081, %v1078
        %v1358 = vpack.c.b16 %v1085, %v1082
        %v1359 = vpack.c.b16 %v1086, %v1083
        %v1360 = vpack.c.b16 %v1087, %v1084
        %v1361 = vpack.c.b16 %v1091, %v1088
        %v1362 = vpack.c.b16 %v1092, %v1089
        %v1363 = vpack.c.b16 %v1093, %v1090
        %v1364 = vpack.c.b16 %v1097, %v1094
        %v1365 = vpack.c.b16 %v1098, %v1095
        %v1366 = vpack.c.b16 %v1099, %v1096
        %v1367 = vpack.c.b16 %v1103, %v1100
        %v1368 = vpack.c.b16 %v1104, %v1101
        %v1369 = vpack.c.b16 %v1105, %v1102
        %v1370 = vpack.c.b16 %v1109, %v1106
        %v1371 = vpack.c.b16 %v1110, %v1107
        %v1372 = vpack.c.b16 %v1111, %v1108
        %v1373 = vpack.c.b16 %v1115, %v1112
        %v1374 = vpack.c.b16 %v1116, %v1113
        %v1375 = vpack.c.b16 %v1117, %v1114
        %v1376 = vpack.c.b16 %v1121, %v1118
        %v1377 = vpack.c.b16 %v1122, %v1119
        %v1378 = vpack.c.b16 %v1123, %v1120
        %v1379 = vpack.c.b16 %v1127, %v1124
        %v1380 = vpack.c.b16 %v1128, %v1125
        %v1381 = vpack.c.b16 %v1129, %v1126
        %v1382 = vpack.c.b16 %v1133, %v1130
        %v1383 = vpack.c.b16 %v1134, %v1131
        %v1384 = vpack.c.b16 %v1135, %v1132
        %v1385 = vpack.c.b16 %v1139, %v1136
        %v1386 = vpack.c.b16 %v1140, %v1137
        %v1387 = vpack.c.b16 %v1141, %v1138
        %v1388 = vpack.c.b16 %v1145, %v1142
        %v1389 = vpack.c.b16 %v1146, %v1143
        %v1390 = vpack.c.b16 %v1147, %v1144
        %v1391 = vpack.c.b16 %v1151, %v1148
        %v1392 = vpack.c.b16 %v1152, %v1149
        %v1393 = vpack.c.b16 %v1153, %v1150
        %v1394 = vpack.c.b16 %v1157, %v1154
        %v1395 = vpack.c.b16 %v1158, %v1155
        %v1396 = vpack.c.b16 %v1159, %v1156
        %v1397 = vpack.c.b16 %v1163, %v1160
        %v1398 = vpack.c.b16 %v1164, %v1161
        %v1399 = vpack.c.b16 %v1165, %v1162
        %v1400 = vpack.c.b16 %v1169, %v1166
        %v1401 = vpack.c.b16 %v1170, %v1167
        %v1402 = vpack.c.b16 %v1171, %v1168
        %v1403 = vpack.c.b16 %v1175, %v1172
        %v1404 = vpack.c.b16 %v1176, %v1173
        %v1405 = vpack.c.b16 %v1177, %v1174
        %v1406 = vpack.c.b16 %v1181, %v1178
        %v1407 = vpack.c.b16 %v1182, %v1179
        %v1408 = vpack.c.b16 %v1183, %v1180
        %v1409 = vpack.c.b16 %v1187, %v1184
        %v1410 = vpack.c.b16 %v1188, %v1185
        %v1411 = vpack.c.b16 %v1189, %v1186
        %v1412 = vpack.c.b16 %v1193, %v1190
        %v1413 = vpack.c.b16 %v1194, %v1191
        %v1414 = vpack.c.b16 %v1195, %v1192
        %v1415 = vpack.c.b16 %v1199, %v1196
        %v1416 = vpack.c.b16 %v1200, %v1197
        %v1417 = vpack.c.b16 %v1201, %v1198
        %v1418 = vpack.c.b16 %v1205, %v1202
        %v1419 = vpack.c.b16 %v1206, %v1203
        %v1420 = vpack.c.b16 %v1207, %v1204
        %v1421 = vpack.c.b16 %v1211, %v1208
        %v1422 = vpack.c.b16 %v1212, %v1209
        %v1423 = vpack.c.b16 %v1213, %v1210
        %v1424 = vpack.c.b16 %v1217, %v1214
        %v1425 = vpack.c.b16 %v1218, %v1215
        %v1426 = vpack.c.b16 %v1219, %v1216
        %v1427 = vpack.c.b16 %v1223, %v1220
        %v1428 = vpack.c.b16 %v1224, %v1221
        %v1429 = vpack.c.b16 %v1225, %v1222
        %v1430 = vpack.c.b16 %v1229, %v1226
        %v1431 = vpack.c.b16 %v1230, %v1227
        %v1432 = vpack.c.b16 %v1231, %v1228
        %v1433 = vpack.c.b16 %v1235, %v1232
        %v1434 = vpack.c.b16 %v1236, %v1233
        %v1435 = vpack.c.b16 %v1237, %v1234
        %v1436 = vpack.c.b16 %v1241, %v1238
        %v1437 = vpack.c.b16 %v1242, %v1239
        %v1438 = vpack.c.b16 %v1243, %v1240
        %v1439 = vpack.c.b16 %v1244, %v1244
        %v1440 = vpack.c.b16 %v1245, %v1245
        %v1441 = vpack.c.b16 %v1246, %v1246
        %vm1572 = vcmask 719872
        %v1574 = vsel %vm1572, %v1249, 0
        %v1577 = vsel %vm1572, %v1252, 0
        %v1580 = vsel %vm1572, %v1255, 0
        %v1583 = vsel %vm1572, %v1258, 0
        %v1586 = vsel %vm1572, %v1261, 0
        %v1589 = vsel %vm1572, %v1264, 0
        %v1592 = vsel %vm1572, %v1267, 0
        %v1595 = vsel %vm1572, %v1270, 0
        %v1598 = vsel %vm1572, %v1273, 0
        %v1601 = vsel %vm1572, %v1276, 0
        %v1604 = vsel %vm1572, %v1279, 0
        %v1607 = vsel %vm1572, %v1282, 0
        %v1610 = vsel %vm1572, %v1285, 0
        %v1613 = vsel %vm1572, %v1288, 0
        %v1616 = vsel %vm1572, %v1291, 0
        %v1619 = vsel %vm1572, %v1294, 0
        %v1622 = vsel %vm1572, %v1297, 0
        %v1625 = vsel %vm1572, %v1300, 0
        %v1628 = vsel %vm1572, %v1303, 0
        %v1631 = vsel %vm1572, %v1306, 0
        %v1634 = vsel %vm1572, %v1309, 0
        %v1637 = vsel %vm1572, %v1312, 0
        %v1640 = vsel %vm1572, %v1315, 0
        %v1643 = vsel %vm1572, %v1318, 0
        %v1646 = vsel %vm1572, %v1321, 0
        %v1649 = vsel %vm1572, %v1324, 0
        %v1652 = vsel %vm1572, %v1327, 0
        %v1655 = vsel %vm1572, %v1330, 0
        %v1658 = vsel %vm1572, %v1333, 0
        %v1661 = vsel %vm1572, %v1336, 0
        %v1664 = vsel %vm1572, %v1339, 0
        %v1667 = vsel %vm1572, %v1342, 0
        %v1670 = vsel %vm1572, %v1345, 0
        %v1673 = vsel %vm1572, %v1348, 0
        %v1676 = vsel %vm1572, %v1351, 0
        %v1679 = vsel %vm1572, %v1354, 0
        %v1682 = vsel %vm1572, %v1357, 0
        %v1685 = vsel %vm1572, %v1360, 0
        %v1688 = vsel %vm1572, %v1363, 0
        %v1691 = vsel %vm1572, %v1366, 0
        %v1694 = vsel %vm1572, %v1369, 0
        %v1697 = vsel %vm1572, %v1372, 0
        %v1700 = vsel %vm1572, %v1375, 0
        %v1703 = vsel %vm1572, %v1378, 0
        %v1706 = vsel %vm1572, %v1381, 0
        %v1709 = vsel %vm1572, %v1384, 0
        %v1712 = vsel %vm1572, %v1387, 0
        %v1715 = vsel %vm1572, %v1390, 0
        %v1718 = vsel %vm1572, %v1393, 0
        %v1721 = vsel %vm1572, %v1396, 0
        %v1724 = vsel %vm1572, %v1399, 0
        %v1727 = vsel %vm1572, %v1402, 0
        %v1730 = vsel %vm1572, %v1405, 0
        %v1733 = vsel %vm1572, %v1408, 0
        %v1736 = vsel %vm1572, %v1411, 0
        %v1739 = vsel %vm1572, %v1414, 0
        %v1742 = vsel %vm1572, %v1417, 0
        %v1745 = vsel %vm1572, %v1420, 0
        %v1748 = vsel %vm1572, %v1423, 0
        %v1751 = vsel %vm1572, %v1426, 0
        %v1754 = vsel %vm1572, %v1429, 0
        %v1757 = vsel %vm1572, %v1432, 0
        %v1760 = vsel %vm1572, %v1435, 0
        %v1763 = vsel %vm1572, %v1438, 0
        %v1766 = vsel %vm1572, %v1441, 0
        %vm1768 = vcmask 1043456
        %v1770 = vsel %vm1768, %v343, 0
        %1772 = vmatprep.subr.bf16.mxu0 0
        %1773 = vmatpush1.bf16.msra.mxu0 %v329
        %1774 = vmatprep.subr.bf16.mxu0 0
        %1775 = vmatpush1.bf16.msra.mxu0 %v328
        %1776 = vmatprep.subr.bf16.mxu0 0
        %1777 = vmatpush1.bf16.msra.mxu0 %v327
        %1778 = vmatprep.subr.bf16.mxu0 0
        %1779 = vmatpush1.bf16.msra.mxu0 %v326
        %1780 = vmatprep.subr.bf16.mxu0 0
        %1781 = vmatpush1.bf16.msra.mxu0 %v325
        %1782 = vmatprep.subr.bf16.mxu0 0
        %1783 = vmatpush1.bf16.msra.mxu0 %v324
        %1784 = vmatprep.subr.bf16.mxu0 0
        %1785 = vmatpush1.bf16.msra.mxu0 %v323
        %1786 = vmatprep.subr.bf16.mxu0 0
        %1787 = vmatpush1.bf16.msra.mxu0 %v322
        %1788 = vmatprep.subr.bf16.mxu0 0
        %1789 = vmatpush2.bf16.msra.mxu0 %v337
        %1790 = vmatprep.subr.bf16.mxu0 0
        %1791 = vmatpush2.bf16.msra.mxu0 %v336
        %1792 = vmatprep.subr.bf16.mxu0 0
        %1793 = vmatpush2.bf16.msra.mxu0 %v335
        %1794 = vmatprep.subr.bf16.mxu0 0
        %1795 = vmatpush2.bf16.msra.mxu0 %v334
        %1796 = vmatprep.subr.bf16.mxu0 0
        %1797 = vmatpush2.bf16.msra.mxu0 %v333
        %1798 = vmatprep.subr.bf16.mxu0 0
        %1799 = vmatpush2.bf16.msra.mxu0 %v332
        %1800 = vmatprep.subr.bf16.mxu0 0
        %1801 = vmatpush2.bf16.msra.mxu0 %v331
        %1802 = vmatprep.subr.bf16.mxu0 0
        %1803 = vmatpush2.bf16.msra.mxu0 %v330
        %1804 = vmatprep.mubr.bf16.mxu0 %v1248
        %1805 = vmatmul.mubr.bf16.gmra.mxu0 %v1247
        %v1806 = vpop.f32.mrf.mxu0
        %v1807 = vadd.f32 0.0, %v1806
        %v1808 = vpop.f32.mrf.mxu0
        %v1809 = vpop.f32.mrf.mxu0
        %v1810 = vadd.f32 0.0, %v1809
        %v1811 = vpop.f32.mrf.mxu0
        %1812 = vmatprep.mubr.bf16.mxu0 %v1251
        %1813 = vmatmul.mubr.bf16.gmra.mxu0 %v1250
        %v1814 = vpop.f32.mrf.mxu0
        %v1815 = vadd.f32 0.0, %v1814
        %v1816 = vpop.f32.mrf.mxu0
        %v1817 = vpop.f32.mrf.mxu0
        %v1818 = vadd.f32 0.0, %v1817
        %v1819 = vpop.f32.mrf.mxu0
        %1820 = vmatprep.mubr.bf16.mxu0 %v1254
        %1821 = vmatmul.mubr.bf16.gmra.mxu0 %v1253
        %v1822 = vpop.f32.mrf.mxu0
        %v1823 = vadd.f32 0.0, %v1822
        %v1824 = vpop.f32.mrf.mxu0
        %v1825 = vpop.f32.mrf.mxu0
        %v1826 = vadd.f32 0.0, %v1825
        %v1827 = vpop.f32.mrf.mxu0
        %1828 = vmatprep.mubr.bf16.mxu0 %v1257
        %1829 = vmatmul.mubr.bf16.gmra.mxu0 %v1256
        %v1830 = vpop.f32.mrf.mxu0
        %v1831 = vadd.f32 0.0, %v1830
        %v1832 = vpop.f32.mrf.mxu0
        %v1833 = vpop.f32.mrf.mxu0
        %v1834 = vadd.f32 0.0, %v1833
        %v1835 = vpop.f32.mrf.mxu0
        %1836 = vmatprep.mubr.bf16.mxu0 %v1260
        %1837 = vmatmul.mubr.bf16.gmra.mxu0 %v1259
        %v1838 = vpop.f32.mrf.mxu0
        %v1839 = vadd.f32 0.0, %v1838
        %v1840 = vpop.f32.mrf.mxu0
        %v1841 = vpop.f32.mrf.mxu0
        %v1842 = vadd.f32 0.0, %v1841
        %v1843 = vpop.f32.mrf.mxu0
        %1844 = vmatprep.mubr.bf16.mxu0 %v1263
        %1845 = vmatmul.mubr.bf16.gmra.mxu0 %v1262
        %v1846 = vpop.f32.mrf.mxu0
        %v1847 = vadd.f32 0.0, %v1846
        %v1848 = vpop.f32.mrf.mxu0
        %v1849 = vpop.f32.mrf.mxu0
        %v1850 = vadd.f32 0.0, %v1849
        %v1851 = vpop.f32.mrf.mxu0
        %1852 = vmatprep.mubr.bf16.mxu0 %v1266
        %1853 = vmatmul.mubr.bf16.gmra.mxu0 %v1265
        %v1854 = vpop.f32.mrf.mxu0
        %v1855 = vadd.f32 0.0, %v1854
        %v1856 = vpop.f32.mrf.mxu0
        %v1857 = vpop.f32.mrf.mxu0
        %v1858 = vadd.f32 0.0, %v1857
        %v1859 = vpop.f32.mrf.mxu0
        %1860 = vmatprep.mubr.bf16.mxu0 %v1269
        %1861 = vmatmul.mubr.bf16.gmra.mxu0 %v1268
        %v1862 = vpop.f32.mrf.mxu0
        %v1863 = vadd.f32 0.0, %v1862
        %v1864 = vpop.f32.mrf.mxu0
        %v1865 = vpop.f32.mrf.mxu0
        %v1866 = vadd.f32 0.0, %v1865
        %v1867 = vpop.f32.mrf.mxu0
        %1868 = vmatprep.mubr.bf16.mxu0 %v1272
        %1869 = vmatmul.mubr.bf16.gmra.mxu0 %v1271
        %v1870 = vpop.f32.mrf.mxu0
        %v1871 = vadd.f32 0.0, %v1870
        %v1872 = vpop.f32.mrf.mxu0
        %v1873 = vpop.f32.mrf.mxu0
        %v1874 = vadd.f32 0.0, %v1873
        %v1875 = vpop.f32.mrf.mxu0
        %1876 = vmatprep.mubr.bf16.mxu0 %v1275
        %1877 = vmatmul.mubr.bf16.gmra.mxu0 %v1274
        %v1878 = vpop.f32.mrf.mxu0
        %v1879 = vadd.f32 0.0, %v1878
        %v1880 = vpop.f32.mrf.mxu0
        %v1881 = vpop.f32.mrf.mxu0
        %v1882 = vadd.f32 0.0, %v1881
        %v1883 = vpop.f32.mrf.mxu0
        %1884 = vmatprep.mubr.bf16.mxu0 %v1278
        %1885 = vmatmul.mubr.bf16.gmra.mxu0 %v1277
        %v1886 = vpop.f32.mrf.mxu0
        %v1887 = vadd.f32 0.0, %v1886
        %v1888 = vpop.f32.mrf.mxu0
        %v1889 = vpop.f32.mrf.mxu0
        %v1890 = vadd.f32 0.0, %v1889
        %v1891 = vpop.f32.mrf.mxu0
        %1892 = vmatprep.mubr.bf16.mxu0 %v1281
        %1893 = vmatmul.mubr.bf16.gmra.mxu0 %v1280
        %v1894 = vpop.f32.mrf.mxu0
        %v1895 = vadd.f32 0.0, %v1894
        %v1896 = vpop.f32.mrf.mxu0
        %v1897 = vpop.f32.mrf.mxu0
        %v1898 = vadd.f32 0.0, %v1897
        %v1899 = vpop.f32.mrf.mxu0
        %1900 = vmatprep.mubr.bf16.mxu0 %v1284
        %1901 = vmatmul.mubr.bf16.gmra.mxu0 %v1283
        %v1902 = vpop.f32.mrf.mxu0
        %v1903 = vadd.f32 0.0, %v1902
        %v1904 = vpop.f32.mrf.mxu0
        %v1905 = vpop.f32.mrf.mxu0
        %v1906 = vadd.f32 0.0, %v1905
        %v1907 = vpop.f32.mrf.mxu0
        %1908 = vmatprep.mubr.bf16.mxu0 %v1287
        %1909 = vmatmul.mubr.bf16.gmra.mxu0 %v1286
        %v1910 = vpop.f32.mrf.mxu0
        %v1911 = vadd.f32 0.0, %v1910
        %v1912 = vpop.f32.mrf.mxu0
        %v1913 = vpop.f32.mrf.mxu0
        %v1914 = vadd.f32 0.0, %v1913
        %v1915 = vpop.f32.mrf.mxu0
        %1916 = vmatprep.mubr.bf16.mxu0 %v1290
        %1917 = vmatmul.mubr.bf16.gmra.mxu0 %v1289
        %v1918 = vpop.f32.mrf.mxu0
        %v1919 = vadd.f32 0.0, %v1918
        %v1920 = vpop.f32.mrf.mxu0
        %v1921 = vpop.f32.mrf.mxu0
        %v1922 = vadd.f32 0.0, %v1921
        %v1923 = vpop.f32.mrf.mxu0
        %1924 = vmatprep.mubr.bf16.mxu0 %v1293
        %1925 = vmatmul.mubr.bf16.gmra.mxu0 %v1292
        %v1926 = vpop.f32.mrf.mxu0
        %v1927 = vadd.f32 0.0, %v1926
        %v1928 = vpop.f32.mrf.mxu0
        %v1929 = vpop.f32.mrf.mxu0
        %v1930 = vadd.f32 0.0, %v1929
        %v1931 = vpop.f32.mrf.mxu0
        %1932 = vmatprep.mubr.bf16.mxu0 %v1296
        %1933 = vmatmul.mubr.bf16.gmra.mxu0 %v1295
        %v1934 = vpop.f32.mrf.mxu0
        %v1935 = vadd.f32 0.0, %v1934
        %v1936 = vpop.f32.mrf.mxu0
        %v1937 = vpop.f32.mrf.mxu0
        %v1938 = vadd.f32 0.0, %v1937
        %v1939 = vpop.f32.mrf.mxu0
        %1940 = vmatprep.mubr.bf16.mxu0 %v1299
        %1941 = vmatmul.mubr.bf16.gmra.mxu0 %v1298
        %v1942 = vpop.f32.mrf.mxu0
        %v1943 = vadd.f32 0.0, %v1942
        %v1944 = vpop.f32.mrf.mxu0
        %v1945 = vpop.f32.mrf.mxu0
        %v1946 = vadd.f32 0.0, %v1945
        %v1947 = vpop.f32.mrf.mxu0
        %1948 = vmatprep.mubr.bf16.mxu0 %v1302
        %1949 = vmatmul.mubr.bf16.gmra.mxu0 %v1301
        %v1950 = vpop.f32.mrf.mxu0
        %v1951 = vadd.f32 0.0, %v1950
        %v1952 = vpop.f32.mrf.mxu0
        %v1953 = vpop.f32.mrf.mxu0
        %v1954 = vadd.f32 0.0, %v1953
        %v1955 = vpop.f32.mrf.mxu0
        %1956 = vmatprep.mubr.bf16.mxu0 %v1305
        %1957 = vmatmul.mubr.bf16.gmra.mxu0 %v1304
        %v1958 = vpop.f32.mrf.mxu0
        %v1959 = vadd.f32 0.0, %v1958
        %v1960 = vpop.f32.mrf.mxu0
        %v1961 = vpop.f32.mrf.mxu0
        %v1962 = vadd.f32 0.0, %v1961
        %v1963 = vpop.f32.mrf.mxu0
        %1964 = vmatprep.mubr.bf16.mxu0 %v1308
        %1965 = vmatmul.mubr.bf16.gmra.mxu0 %v1307
        %v1966 = vpop.f32.mrf.mxu0
        %v1967 = vadd.f32 0.0, %v1966
        %v1968 = vpop.f32.mrf.mxu0
        %v1969 = vpop.f32.mrf.mxu0
        %v1970 = vadd.f32 0.0, %v1969
        %v1971 = vpop.f32.mrf.mxu0
        %1972 = vmatprep.mubr.bf16.mxu0 %v1311
        %1973 = vmatmul.mubr.bf16.gmra.mxu0 %v1310
        %v1974 = vpop.f32.mrf.mxu0
        %v1975 = vadd.f32 0.0, %v1974
        %v1976 = vpop.f32.mrf.mxu0
        %v1977 = vpop.f32.mrf.mxu0
        %v1978 = vadd.f32 0.0, %v1977
        %v1979 = vpop.f32.mrf.mxu0
        %1980 = vmatprep.mubr.bf16.mxu0 %v1314
        %1981 = vmatmul.mubr.bf16.gmra.mxu0 %v1313
        %v1982 = vpop.f32.mrf.mxu0
        %v1983 = vadd.f32 0.0, %v1982
        %v1984 = vpop.f32.mrf.mxu0
        %v1985 = vpop.f32.mrf.mxu0
        %v1986 = vadd.f32 0.0, %v1985
        %v1987 = vpop.f32.mrf.mxu0
        %1988 = vmatprep.mubr.bf16.mxu0 %v1317
        %1989 = vmatmul.mubr.bf16.gmra.mxu0 %v1316
        %v1990 = vpop.f32.mrf.mxu0
        %v1991 = vadd.f32 0.0, %v1990
        %v1992 = vpop.f32.mrf.mxu0
        %v1993 = vpop.f32.mrf.mxu0
        %v1994 = vadd.f32 0.0, %v1993
        %v1995 = vpop.f32.mrf.mxu0
        %1996 = vmatprep.mubr.bf16.mxu0 %v1320
        %1997 = vmatmul.mubr.bf16.gmra.mxu0 %v1319
        %v1998 = vpop.f32.mrf.mxu0
        %v1999 = vadd.f32 0.0, %v1998
        %v2000 = vpop.f32.mrf.mxu0
        %v2001 = vpop.f32.mrf.mxu0
        %v2002 = vadd.f32 0.0, %v2001
        %v2003 = vpop.f32.mrf.mxu0
        %2004 = vmatprep.mubr.bf16.mxu0 %v1323
        %2005 = vmatmul.mubr.bf16.gmra.mxu0 %v1322
        %v2006 = vpop.f32.mrf.mxu0
        %v2007 = vadd.f32 0.0, %v2006
        %v2008 = vpop.f32.mrf.mxu0
        %v2009 = vpop.f32.mrf.mxu0
        %v2010 = vadd.f32 0.0, %v2009
        %v2011 = vpop.f32.mrf.mxu0
        %2012 = vmatprep.mubr.bf16.mxu0 %v1326
        %2013 = vmatmul.mubr.bf16.gmra.mxu0 %v1325
        %v2014 = vpop.f32.mrf.mxu0
        %v2015 = vadd.f32 0.0, %v2014
        %v2016 = vpop.f32.mrf.mxu0
        %v2017 = vpop.f32.mrf.mxu0
        %v2018 = vadd.f32 0.0, %v2017
        %v2019 = vpop.f32.mrf.mxu0
        %2020 = vmatprep.mubr.bf16.mxu0 %v1329
        %2021 = vmatmul.mubr.bf16.gmra.mxu0 %v1328
        %v2022 = vpop.f32.mrf.mxu0
        %v2023 = vadd.f32 0.0, %v2022
        %v2024 = vpop.f32.mrf.mxu0
        %v2025 = vpop.f32.mrf.mxu0
        %v2026 = vadd.f32 0.0, %v2025
        %v2027 = vpop.f32.mrf.mxu0
        %2028 = vmatprep.mubr.bf16.mxu0 %v1332
        %2029 = vmatmul.mubr.bf16.gmra.mxu0 %v1331
        %v2030 = vpop.f32.mrf.mxu0
        %v2031 = vadd.f32 0.0, %v2030
        %v2032 = vpop.f32.mrf.mxu0
        %v2033 = vpop.f32.mrf.mxu0
        %v2034 = vadd.f32 0.0, %v2033
        %v2035 = vpop.f32.mrf.mxu0
        %2036 = vmatprep.mubr.bf16.mxu0 %v1335
        %2037 = vmatmul.mubr.bf16.gmra.mxu0 %v1334
        %v2038 = vpop.f32.mrf.mxu0
        %v2039 = vadd.f32 0.0, %v2038
        %v2040 = vpop.f32.mrf.mxu0
        %v2041 = vpop.f32.mrf.mxu0
        %v2042 = vadd.f32 0.0, %v2041
        %v2043 = vpop.f32.mrf.mxu0
        %2044 = vmatprep.mubr.bf16.mxu0 %v1338
        %2045 = vmatmul.mubr.bf16.gmra.mxu0 %v1337
        %v2046 = vpop.f32.mrf.mxu0
        %v2047 = vadd.f32 0.0, %v2046
        %v2048 = vpop.f32.mrf.mxu0
        %v2049 = vpop.f32.mrf.mxu0
        %v2050 = vadd.f32 0.0, %v2049
        %v2051 = vpop.f32.mrf.mxu0
        %2052 = vmatprep.mubr.bf16.mxu0 %v1341
        %2053 = vmatmul.mubr.bf16.gmra.mxu0 %v1340
        %v2054 = vpop.f32.mrf.mxu0
        %v2055 = vadd.f32 0.0, %v2054
        %v2056 = vpop.f32.mrf.mxu0
        %v2057 = vpop.f32.mrf.mxu0
        %v2058 = vadd.f32 0.0, %v2057
        %v2059 = vpop.f32.mrf.mxu0
        %2060 = vmatprep.mubr.bf16.mxu0 %v1344
        %2061 = vmatmul.mubr.bf16.gmra.mxu0 %v1343
        %v2062 = vpop.f32.mrf.mxu0
        %v2063 = vadd.f32 0.0, %v2062
        %v2064 = vpop.f32.mrf.mxu0
        %v2065 = vpop.f32.mrf.mxu0
        %v2066 = vadd.f32 0.0, %v2065
        %v2067 = vpop.f32.mrf.mxu0
        %2068 = vmatprep.mubr.bf16.mxu0 %v1347
        %2069 = vmatmul.mubr.bf16.gmra.mxu0 %v1346
        %v2070 = vpop.f32.mrf.mxu0
        %v2071 = vadd.f32 0.0, %v2070
        %v2072 = vpop.f32.mrf.mxu0
        %v2073 = vpop.f32.mrf.mxu0
        %v2074 = vadd.f32 0.0, %v2073
        %v2075 = vpop.f32.mrf.mxu0
        %2076 = vmatprep.mubr.bf16.mxu0 %v1350
        %2077 = vmatmul.mubr.bf16.gmra.mxu0 %v1349
        %v2078 = vpop.f32.mrf.mxu0
        %v2079 = vadd.f32 0.0, %v2078
        %v2080 = vpop.f32.mrf.mxu0
        %v2081 = vpop.f32.mrf.mxu0
        %v2082 = vadd.f32 0.0, %v2081
        %v2083 = vpop.f32.mrf.mxu0
        %2084 = vmatprep.mubr.bf16.mxu0 %v1353
        %2085 = vmatmul.mubr.bf16.gmra.mxu0 %v1352
        %v2086 = vpop.f32.mrf.mxu0
        %v2087 = vadd.f32 0.0, %v2086
        %v2088 = vpop.f32.mrf.mxu0
        %v2089 = vpop.f32.mrf.mxu0
        %v2090 = vadd.f32 0.0, %v2089
        %v2091 = vpop.f32.mrf.mxu0
        %2092 = vmatprep.mubr.bf16.mxu0 %v1356
        %2093 = vmatmul.mubr.bf16.gmra.mxu0 %v1355
        %v2094 = vpop.f32.mrf.mxu0
        %v2095 = vadd.f32 0.0, %v2094
        %v2096 = vpop.f32.mrf.mxu0
        %v2097 = vpop.f32.mrf.mxu0
        %v2098 = vadd.f32 0.0, %v2097
        %v2099 = vpop.f32.mrf.mxu0
        %2100 = vmatprep.mubr.bf16.mxu0 %v1359
        %2101 = vmatmul.mubr.bf16.gmra.mxu0 %v1358
        %v2102 = vpop.f32.mrf.mxu0
        %v2103 = vadd.f32 0.0, %v2102
        %v2104 = vpop.f32.mrf.mxu0
        %v2105 = vpop.f32.mrf.mxu0
        %v2106 = vadd.f32 0.0, %v2105
        %v2107 = vpop.f32.mrf.mxu0
        %2108 = vmatprep.mubr.bf16.mxu0 %v1362
        %2109 = vmatmul.mubr.bf16.gmra.mxu0 %v1361
        %v2110 = vpop.f32.mrf.mxu0
        %v2111 = vadd.f32 0.0, %v2110
        %v2112 = vpop.f32.mrf.mxu0
        %v2113 = vpop.f32.mrf.mxu0
        %v2114 = vadd.f32 0.0, %v2113
        %v2115 = vpop.f32.mrf.mxu0
        %2116 = vmatprep.mubr.bf16.mxu0 %v1365
        %2117 = vmatmul.mubr.bf16.gmra.mxu0 %v1364
        %v2118 = vpop.f32.mrf.mxu0
        %v2119 = vadd.f32 0.0, %v2118
        %v2120 = vpop.f32.mrf.mxu0
        %v2121 = vpop.f32.mrf.mxu0
        %v2122 = vadd.f32 0.0, %v2121
        %v2123 = vpop.f32.mrf.mxu0
        %2124 = vmatprep.mubr.bf16.mxu0 %v1368
        %2125 = vmatmul.mubr.bf16.gmra.mxu0 %v1367
        %v2126 = vpop.f32.mrf.mxu0
        %v2127 = vadd.f32 0.0, %v2126
        %v2128 = vpop.f32.mrf.mxu0
        %v2129 = vpop.f32.mrf.mxu0
        %v2130 = vadd.f32 0.0, %v2129
        %v2131 = vpop.f32.mrf.mxu0
        %2132 = vmatprep.mubr.bf16.mxu0 %v1371
        %2133 = vmatmul.mubr.bf16.gmra.mxu0 %v1370
        %v2134 = vpop.f32.mrf.mxu0
        %v2135 = vadd.f32 0.0, %v2134
        %v2136 = vpop.f32.mrf.mxu0
        %v2137 = vpop.f32.mrf.mxu0
        %v2138 = vadd.f32 0.0, %v2137
        %v2139 = vpop.f32.mrf.mxu0
        %2140 = vmatprep.mubr.bf16.mxu0 %v1374
        %2141 = vmatmul.mubr.bf16.gmra.mxu0 %v1373
        %v2142 = vpop.f32.mrf.mxu0
        %v2143 = vadd.f32 0.0, %v2142
        %v2144 = vpop.f32.mrf.mxu0
        %v2145 = vpop.f32.mrf.mxu0
        %v2146 = vadd.f32 0.0, %v2145
        %v2147 = vpop.f32.mrf.mxu0
        %2148 = vmatprep.mubr.bf16.mxu0 %v1377
        %2149 = vmatmul.mubr.bf16.gmra.mxu0 %v1376
        %v2150 = vpop.f32.mrf.mxu0
        %v2151 = vadd.f32 0.0, %v2150
        %v2152 = vpop.f32.mrf.mxu0
        %v2153 = vpop.f32.mrf.mxu0
        %v2154 = vadd.f32 0.0, %v2153
        %v2155 = vpop.f32.mrf.mxu0
        %2156 = vmatprep.mubr.bf16.mxu0 %v1380
        %2157 = vmatmul.mubr.bf16.gmra.mxu0 %v1379
        %v2158 = vpop.f32.mrf.mxu0
        %v2159 = vadd.f32 0.0, %v2158
        %v2160 = vpop.f32.mrf.mxu0
        %v2161 = vpop.f32.mrf.mxu0
        %v2162 = vadd.f32 0.0, %v2161
        %v2163 = vpop.f32.mrf.mxu0
        %2164 = vmatprep.mubr.bf16.mxu0 %v1383
        %2165 = vmatmul.mubr.bf16.gmra.mxu0 %v1382
        %v2166 = vpop.f32.mrf.mxu0
        %v2167 = vadd.f32 0.0, %v2166
        %v2168 = vpop.f32.mrf.mxu0
        %v2169 = vpop.f32.mrf.mxu0
        %v2170 = vadd.f32 0.0, %v2169
        %v2171 = vpop.f32.mrf.mxu0
        %2172 = vmatprep.mubr.bf16.mxu0 %v1386
        %2173 = vmatmul.mubr.bf16.gmra.mxu0 %v1385
        %v2174 = vpop.f32.mrf.mxu0
        %v2175 = vadd.f32 0.0, %v2174
        %v2176 = vpop.f32.mrf.mxu0
        %v2177 = vpop.f32.mrf.mxu0
        %v2178 = vadd.f32 0.0, %v2177
        %v2179 = vpop.f32.mrf.mxu0
        %2180 = vmatprep.mubr.bf16.mxu0 %v1389
        %2181 = vmatmul.mubr.bf16.gmra.mxu0 %v1388
        %v2182 = vpop.f32.mrf.mxu0
        %v2183 = vadd.f32 0.0, %v2182
        %v2184 = vpop.f32.mrf.mxu0
        %v2185 = vpop.f32.mrf.mxu0
        %v2186 = vadd.f32 0.0, %v2185
        %v2187 = vpop.f32.mrf.mxu0
        %2188 = vmatprep.mubr.bf16.mxu0 %v1392
        %2189 = vmatmul.mubr.bf16.gmra.mxu0 %v1391
        %v2190 = vpop.f32.mrf.mxu0
        %v2191 = vadd.f32 0.0, %v2190
        %v2192 = vpop.f32.mrf.mxu0
        %v2193 = vpop.f32.mrf.mxu0
        %v2194 = vadd.f32 0.0, %v2193
        %v2195 = vpop.f32.mrf.mxu0
        %2196 = vmatprep.mubr.bf16.mxu0 %v1395
        %2197 = vmatmul.mubr.bf16.gmra.mxu0 %v1394
        %v2198 = vpop.f32.mrf.mxu0
        %v2199 = vadd.f32 0.0, %v2198
        %v2200 = vpop.f32.mrf.mxu0
        %v2201 = vpop.f32.mrf.mxu0
        %v2202 = vadd.f32 0.0, %v2201
        %v2203 = vpop.f32.mrf.mxu0
        %2204 = vmatprep.mubr.bf16.mxu0 %v1398
        %2205 = vmatmul.mubr.bf16.gmra.mxu0 %v1397
        %v2206 = vpop.f32.mrf.mxu0
        %v2207 = vadd.f32 0.0, %v2206
        %v2208 = vpop.f32.mrf.mxu0
        %v2209 = vpop.f32.mrf.mxu0
        %v2210 = vadd.f32 0.0, %v2209
        %v2211 = vpop.f32.mrf.mxu0
        %2212 = vmatprep.mubr.bf16.mxu0 %v1401
        %2213 = vmatmul.mubr.bf16.gmra.mxu0 %v1400
        %v2214 = vpop.f32.mrf.mxu0
        %v2215 = vadd.f32 0.0, %v2214
        %v2216 = vpop.f32.mrf.mxu0
        %v2217 = vpop.f32.mrf.mxu0
        %v2218 = vadd.f32 0.0, %v2217
        %v2219 = vpop.f32.mrf.mxu0
        %2220 = vmatprep.mubr.bf16.mxu0 %v1404
        %2221 = vmatmul.mubr.bf16.gmra.mxu0 %v1403
        %v2222 = vpop.f32.mrf.mxu0
        %v2223 = vadd.f32 0.0, %v2222
        %v2224 = vpop.f32.mrf.mxu0
        %v2225 = vpop.f32.mrf.mxu0
        %v2226 = vadd.f32 0.0, %v2225
        %v2227 = vpop.f32.mrf.mxu0
        %2228 = vmatprep.mubr.bf16.mxu0 %v1407
        %2229 = vmatmul.mubr.bf16.gmra.mxu0 %v1406
        %v2230 = vpop.f32.mrf.mxu0
        %v2231 = vadd.f32 0.0, %v2230
        %v2232 = vpop.f32.mrf.mxu0
        %v2233 = vpop.f32.mrf.mxu0
        %v2234 = vadd.f32 0.0, %v2233
        %v2235 = vpop.f32.mrf.mxu0
        %2236 = vmatprep.mubr.bf16.mxu0 %v1410
        %2237 = vmatmul.mubr.bf16.gmra.mxu0 %v1409
        %v2238 = vpop.f32.mrf.mxu0
        %v2239 = vadd.f32 0.0, %v2238
        %v2240 = vpop.f32.mrf.mxu0
        %v2241 = vpop.f32.mrf.mxu0
        %v2242 = vadd.f32 0.0, %v2241
        %v2243 = vpop.f32.mrf.mxu0
        %2244 = vmatprep.mubr.bf16.mxu0 %v1413
        %2245 = vmatmul.mubr.bf16.gmra.mxu0 %v1412
        %v2246 = vpop.f32.mrf.mxu0
        %v2247 = vadd.f32 0.0, %v2246
        %v2248 = vpop.f32.mrf.mxu0
        %v2249 = vpop.f32.mrf.mxu0
        %v2250 = vadd.f32 0.0, %v2249
        %v2251 = vpop.f32.mrf.mxu0
        %2252 = vmatprep.mubr.bf16.mxu0 %v1416
        %2253 = vmatmul.mubr.bf16.gmra.mxu0 %v1415
        %v2254 = vpop.f32.mrf.mxu0
        %v2255 = vadd.f32 0.0, %v2254
        %v2256 = vpop.f32.mrf.mxu0
        %v2257 = vpop.f32.mrf.mxu0
        %v2258 = vadd.f32 0.0, %v2257
        %v2259 = vpop.f32.mrf.mxu0
        %2260 = vmatprep.mubr.bf16.mxu0 %v1419
        %2261 = vmatmul.mubr.bf16.gmra.mxu0 %v1418
        %v2262 = vpop.f32.mrf.mxu0
        %v2263 = vadd.f32 0.0, %v2262
        %v2264 = vpop.f32.mrf.mxu0
        %v2265 = vpop.f32.mrf.mxu0
        %v2266 = vadd.f32 0.0, %v2265
        %v2267 = vpop.f32.mrf.mxu0
        %2268 = vmatprep.mubr.bf16.mxu0 %v1422
        %2269 = vmatmul.mubr.bf16.gmra.mxu0 %v1421
        %v2270 = vpop.f32.mrf.mxu0
        %v2271 = vadd.f32 0.0, %v2270
        %v2272 = vpop.f32.mrf.mxu0
        %v2273 = vpop.f32.mrf.mxu0
        %v2274 = vadd.f32 0.0, %v2273
        %v2275 = vpop.f32.mrf.mxu0
        %2276 = vmatprep.mubr.bf16.mxu0 %v1425
        %2277 = vmatmul.mubr.bf16.gmra.mxu0 %v1424
        %v2278 = vpop.f32.mrf.mxu0
        %v2279 = vadd.f32 0.0, %v2278
        %v2280 = vpop.f32.mrf.mxu0
        %v2281 = vpop.f32.mrf.mxu0
        %v2282 = vadd.f32 0.0, %v2281
        %v2283 = vpop.f32.mrf.mxu0
        %2284 = vmatprep.mubr.bf16.mxu0 %v1428
        %2285 = vmatmul.mubr.bf16.gmra.mxu0 %v1427
        %v2286 = vpop.f32.mrf.mxu0
        %v2287 = vadd.f32 0.0, %v2286
        %v2288 = vpop.f32.mrf.mxu0
        %v2289 = vpop.f32.mrf.mxu0
        %v2290 = vadd.f32 0.0, %v2289
        %v2291 = vpop.f32.mrf.mxu0
        %2292 = vmatprep.mubr.bf16.mxu0 %v1431
        %2293 = vmatmul.mubr.bf16.gmra.mxu0 %v1430
        %v2294 = vpop.f32.mrf.mxu0
        %v2295 = vadd.f32 0.0, %v2294
        %v2296 = vpop.f32.mrf.mxu0
        %v2297 = vpop.f32.mrf.mxu0
        %v2298 = vadd.f32 0.0, %v2297
        %v2299 = vpop.f32.mrf.mxu0
        %2300 = vmatprep.mubr.bf16.mxu0 %v1434
        %2301 = vmatmul.mubr.bf16.gmra.mxu0 %v1433
        %v2302 = vpop.f32.mrf.mxu0
        %v2303 = vadd.f32 0.0, %v2302
        %v2304 = vpop.f32.mrf.mxu0
        %v2305 = vpop.f32.mrf.mxu0
        %v2306 = vadd.f32 0.0, %v2305
        %v2307 = vpop.f32.mrf.mxu0
        %2308 = vmatprep.mubr.bf16.mxu0 %v1437
        %2309 = vmatmul.mubr.bf16.gmra.mxu0 %v1436
        %v2310 = vpop.f32.mrf.mxu0
        %v2311 = vadd.f32 0.0, %v2310
        %v2312 = vpop.f32.mrf.mxu0
        %v2313 = vpop.f32.mrf.mxu0
        %v2314 = vadd.f32 0.0, %v2313
        %v2315 = vpop.f32.mrf.mxu0
        %2316 = vmatprep.mubr.bf16.mxu0 %v1440
        %2317 = vmatmul.mubr.bf16.gmra.mxu0 %v1439
        %v2318 = vpop.f32.mrf.mxu0
        %v2319 = vadd.f32 0.0, %v2318
        %v2320 = vpop.f32.mrf.mxu0
        %v2321 = vpop.f32.mrf.mxu0
        %v2322 = vpop.f32.mrf.mxu0
        %2323 = vdwg.mxu0
        %2324 = vmatprep.subr.bf16.mxu0 0
        %2325 = vmatpush1.bf16.msra.mxu0 0
        %2326 = vmatprep.subr.bf16.mxu0 0
        %2327 = vmatpush1.bf16.msra.mxu0 0
        %2328 = vmatprep.subr.bf16.mxu0 0
        %2329 = vmatpush1.bf16.msra.mxu0 %v1770
        %2330 = vmatprep.subr.bf16.mxu0 0
        %2331 = vmatpush1.bf16.msra.mxu0 %v342
        %2332 = vmatprep.subr.bf16.mxu0 0
        %2333 = vmatpush1.bf16.msra.mxu0 %v341
        %2334 = vmatprep.subr.bf16.mxu0 0
        %2335 = vmatpush1.bf16.msra.mxu0 %v340
        %2336 = vmatprep.subr.bf16.mxu0 0
        %2337 = vmatpush1.bf16.msra.mxu0 %v339
        %2338 = vmatprep.subr.bf16.mxu0 0
        %2339 = vmatpush1.bf16.msra.mxu0 %v338
        %2340 = vmatprep.subr.bf16.mxu0 0
        %2341 = vmatpush2.bf16.msra.mxu0 0
        %2342 = vmatprep.subr.bf16.mxu0 0
        %2343 = vmatpush2.bf16.msra.mxu0 0
        %2344 = vmatprep.subr.bf16.mxu0 0
        %2345 = vmatpush2.bf16.msra.mxu0 0
        %2346 = vmatprep.subr.bf16.mxu0 0
        %2347 = vmatpush2.bf16.msra.mxu0 0
        %2348 = vmatprep.subr.bf16.mxu0 0
        %2349 = vmatpush2.bf16.msra.mxu0 0
        %2350 = vmatprep.subr.bf16.mxu0 0
        %2351 = vmatpush2.bf16.msra.mxu0 0
        %2352 = vmatprep.subr.bf16.mxu0 0
        %2353 = vmatpush2.bf16.msra.mxu0 0
        %2354 = vmatprep.subr.bf16.mxu0 0
        %2355 = vmatpush2.bf16.msra.mxu0 0
        %2356 = vmatprep.mubr.bf16.mxu0 0
        %2357 = vmatmul.mubr.bf16.gmra.mxu0 %v1574
        %v2358 = vpop.f32.mrf.mxu0
        %v2359 = vadd.f32 %v1807, %v2358
        %v2360 = vpop.f32.mrf.mxu0
        %v2361 = vpop.f32.mrf.mxu0
        %v2362 = vadd.f32 %v1810, %v2361
        %v2363 = vpop.f32.mrf.mxu0
        %2364 = vmatprep.mubr.bf16.mxu0 0
        %2365 = vmatmul.mubr.bf16.gmra.mxu0 %v1577
        %v2366 = vpop.f32.mrf.mxu0
        %v2367 = vadd.f32 %v1815, %v2366
        %v2368 = vpop.f32.mrf.mxu0
        %v2369 = vpop.f32.mrf.mxu0
        %v2370 = vadd.f32 %v1818, %v2369
        %v2371 = vpop.f32.mrf.mxu0
        %2372 = vmatprep.mubr.bf16.mxu0 0
        %2373 = vmatmul.mubr.bf16.gmra.mxu0 %v1580
        %v2374 = vpop.f32.mrf.mxu0
        %v2375 = vadd.f32 %v1823, %v2374
        %v2376 = vpop.f32.mrf.mxu0
        %v2377 = vpop.f32.mrf.mxu0
        %v2378 = vadd.f32 %v1826, %v2377
        %v2379 = vpop.f32.mrf.mxu0
        %2380 = vmatprep.mubr.bf16.mxu0 0
        %2381 = vmatmul.mubr.bf16.gmra.mxu0 %v1583
        %v2382 = vpop.f32.mrf.mxu0
        %v2383 = vadd.f32 %v1831, %v2382
        %v2384 = vpop.f32.mrf.mxu0
        %v2385 = vpop.f32.mrf.mxu0
        %v2386 = vadd.f32 %v1834, %v2385
        %v2387 = vpop.f32.mrf.mxu0
        %2388 = vmatprep.mubr.bf16.mxu0 0
        %2389 = vmatmul.mubr.bf16.gmra.mxu0 %v1586
        %v2390 = vpop.f32.mrf.mxu0
        %v2391 = vadd.f32 %v1839, %v2390
        %v2392 = vpop.f32.mrf.mxu0
        %v2393 = vpop.f32.mrf.mxu0
        %v2394 = vadd.f32 %v1842, %v2393
        %v2395 = vpop.f32.mrf.mxu0
        %2396 = vmatprep.mubr.bf16.mxu0 0
        %2397 = vmatmul.mubr.bf16.gmra.mxu0 %v1589
        %v2398 = vpop.f32.mrf.mxu0
        %v2399 = vadd.f32 %v1847, %v2398
        %v2400 = vpop.f32.mrf.mxu0
        %v2401 = vpop.f32.mrf.mxu0
        %v2402 = vadd.f32 %v1850, %v2401
        %v2403 = vpop.f32.mrf.mxu0
        %2404 = vmatprep.mubr.bf16.mxu0 0
        %2405 = vmatmul.mubr.bf16.gmra.mxu0 %v1592
        %v2406 = vpop.f32.mrf.mxu0
        %v2407 = vadd.f32 %v1855, %v2406
        %v2408 = vpop.f32.mrf.mxu0
        %v2409 = vpop.f32.mrf.mxu0
        %v2410 = vadd.f32 %v1858, %v2409
        %v2411 = vpop.f32.mrf.mxu0
        %2412 = vmatprep.mubr.bf16.mxu0 0
        %2413 = vmatmul.mubr.bf16.gmra.mxu0 %v1595
        %v2414 = vpop.f32.mrf.mxu0
        %v2415 = vadd.f32 %v1863, %v2414
        %v2416 = vpop.f32.mrf.mxu0
        %v2417 = vpop.f32.mrf.mxu0
        %v2418 = vadd.f32 %v1866, %v2417
        %v2419 = vpop.f32.mrf.mxu0
        %2420 = vmatprep.mubr.bf16.mxu0 0
        %2421 = vmatmul.mubr.bf16.gmra.mxu0 %v1598
        %v2422 = vpop.f32.mrf.mxu0
        %v2423 = vadd.f32 %v1871, %v2422
        %v2424 = vpop.f32.mrf.mxu0
        %v2425 = vpop.f32.mrf.mxu0
        %v2426 = vadd.f32 %v1874, %v2425
        %v2427 = vpop.f32.mrf.mxu0
        %2428 = vmatprep.mubr.bf16.mxu0 0
        %2429 = vmatmul.mubr.bf16.gmra.mxu0 %v1601
        %v2430 = vpop.f32.mrf.mxu0
        %v2431 = vadd.f32 %v1879, %v2430
        %v2432 = vpop.f32.mrf.mxu0
        %v2433 = vpop.f32.mrf.mxu0
        %v2434 = vadd.f32 %v1882, %v2433
        %v2435 = vpop.f32.mrf.mxu0
        %2436 = vmatprep.mubr.bf16.mxu0 0
        %2437 = vmatmul.mubr.bf16.gmra.mxu0 %v1604
        %v2438 = vpop.f32.mrf.mxu0
        %v2439 = vadd.f32 %v1887, %v2438
        %v2440 = vpop.f32.mrf.mxu0
        %v2441 = vpop.f32.mrf.mxu0
        %v2442 = vadd.f32 %v1890, %v2441
        %v2443 = vpop.f32.mrf.mxu0
        %2444 = vmatprep.mubr.bf16.mxu0 0
        %2445 = vmatmul.mubr.bf16.gmra.mxu0 %v1607
        %v2446 = vpop.f32.mrf.mxu0
        %v2447 = vadd.f32 %v1895, %v2446
        %v2448 = vpop.f32.mrf.mxu0
        %v2449 = vpop.f32.mrf.mxu0
        %v2450 = vadd.f32 %v1898, %v2449
        %v2451 = vpop.f32.mrf.mxu0
        %2452 = vmatprep.mubr.bf16.mxu0 0
        %2453 = vmatmul.mubr.bf16.gmra.mxu0 %v1610
        %v2454 = vpop.f32.mrf.mxu0
        %v2455 = vadd.f32 %v1903, %v2454
        %v2456 = vpop.f32.mrf.mxu0
        %v2457 = vpop.f32.mrf.mxu0
        %v2458 = vadd.f32 %v1906, %v2457
        %v2459 = vpop.f32.mrf.mxu0
        %2460 = vmatprep.mubr.bf16.mxu0 0
        %2461 = vmatmul.mubr.bf16.gmra.mxu0 %v1613
        %v2462 = vpop.f32.mrf.mxu0
        %v2463 = vadd.f32 %v1911, %v2462
        %v2464 = vpop.f32.mrf.mxu0
        %v2465 = vpop.f32.mrf.mxu0
        %v2466 = vadd.f32 %v1914, %v2465
        %v2467 = vpop.f32.mrf.mxu0
        %2468 = vmatprep.mubr.bf16.mxu0 0
        %2469 = vmatmul.mubr.bf16.gmra.mxu0 %v1616
        %v2470 = vpop.f32.mrf.mxu0
        %v2471 = vadd.f32 %v1919, %v2470
        %v2472 = vpop.f32.mrf.mxu0
        %v2473 = vpop.f32.mrf.mxu0
        %v2474 = vadd.f32 %v1922, %v2473
        %v2475 = vpop.f32.mrf.mxu0
        %2476 = vmatprep.mubr.bf16.mxu0 0
        %2477 = vmatmul.mubr.bf16.gmra.mxu0 %v1619
        %v2478 = vpop.f32.mrf.mxu0
        %v2479 = vadd.f32 %v1927, %v2478
        %v2480 = vpop.f32.mrf.mxu0
        %v2481 = vpop.f32.mrf.mxu0
        %v2482 = vadd.f32 %v1930, %v2481
        %v2483 = vpop.f32.mrf.mxu0
        %2484 = vmatprep.mubr.bf16.mxu0 0
        %2485 = vmatmul.mubr.bf16.gmra.mxu0 %v1622
        %v2486 = vpop.f32.mrf.mxu0
        %v2487 = vadd.f32 %v1935, %v2486
        %v2488 = vpop.f32.mrf.mxu0
        %v2489 = vpop.f32.mrf.mxu0
        %v2490 = vadd.f32 %v1938, %v2489
        %v2491 = vpop.f32.mrf.mxu0
        %2492 = vmatprep.mubr.bf16.mxu0 0
        %2493 = vmatmul.mubr.bf16.gmra.mxu0 %v1625
        %v2494 = vpop.f32.mrf.mxu0
        %v2495 = vadd.f32 %v1943, %v2494
        %v2496 = vpop.f32.mrf.mxu0
        %v2497 = vpop.f32.mrf.mxu0
        %v2498 = vadd.f32 %v1946, %v2497
        %v2499 = vpop.f32.mrf.mxu0
        %2500 = vmatprep.mubr.bf16.mxu0 0
        %2501 = vmatmul.mubr.bf16.gmra.mxu0 %v1628
        %v2502 = vpop.f32.mrf.mxu0
        %v2503 = vadd.f32 %v1951, %v2502
        %v2504 = vpop.f32.mrf.mxu0
        %v2505 = vpop.f32.mrf.mxu0
        %v2506 = vadd.f32 %v1954, %v2505
        %v2507 = vpop.f32.mrf.mxu0
        %2508 = vmatprep.mubr.bf16.mxu0 0
        %2509 = vmatmul.mubr.bf16.gmra.mxu0 %v1631
        %v2510 = vpop.f32.mrf.mxu0
        %v2511 = vadd.f32 %v1959, %v2510
        %v2512 = vpop.f32.mrf.mxu0
        %v2513 = vpop.f32.mrf.mxu0
        %v2514 = vadd.f32 %v1962, %v2513
        %v2515 = vpop.f32.mrf.mxu0
        %2516 = vmatprep.mubr.bf16.mxu0 0
        %2517 = vmatmul.mubr.bf16.gmra.mxu0 %v1634
        %v2518 = vpop.f32.mrf.mxu0
        %v2519 = vadd.f32 %v1967, %v2518
        %v2520 = vpop.f32.mrf.mxu0
        %v2521 = vpop.f32.mrf.mxu0
        %v2522 = vadd.f32 %v1970, %v2521
        %v2523 = vpop.f32.mrf.mxu0
        %2524 = vmatprep.mubr.bf16.mxu0 0
        %2525 = vmatmul.mubr.bf16.gmra.mxu0 %v1637
        %v2526 = vpop.f32.mrf.mxu0
        %v2527 = vadd.f32 %v1975, %v2526
        %v2528 = vpop.f32.mrf.mxu0
        %v2529 = vpop.f32.mrf.mxu0
        %v2530 = vadd.f32 %v1978, %v2529
        %v2531 = vpop.f32.mrf.mxu0
        %2532 = vmatprep.mubr.bf16.mxu0 0
        %2533 = vmatmul.mubr.bf16.gmra.mxu0 %v1640
        %v2534 = vpop.f32.mrf.mxu0
        %v2535 = vadd.f32 %v1983, %v2534
        %v2536 = vpop.f32.mrf.mxu0
        %v2537 = vpop.f32.mrf.mxu0
        %v2538 = vadd.f32 %v1986, %v2537
        %v2539 = vpop.f32.mrf.mxu0
        %2540 = vmatprep.mubr.bf16.mxu0 0
        %2541 = vmatmul.mubr.bf16.gmra.mxu0 %v1643
        %v2542 = vpop.f32.mrf.mxu0
        %v2543 = vadd.f32 %v1991, %v2542
        %v2544 = vpop.f32.mrf.mxu0
        %v2545 = vpop.f32.mrf.mxu0
        %v2546 = vadd.f32 %v1994, %v2545
        %v2547 = vpop.f32.mrf.mxu0
        %2548 = vmatprep.mubr.bf16.mxu0 0
        %2549 = vmatmul.mubr.bf16.gmra.mxu0 %v1646
        %v2550 = vpop.f32.mrf.mxu0
        %v2551 = vadd.f32 %v1999, %v2550
        %v2552 = vpop.f32.mrf.mxu0
        %v2553 = vpop.f32.mrf.mxu0
        %v2554 = vadd.f32 %v2002, %v2553
        %v2555 = vpop.f32.mrf.mxu0
        %2556 = vmatprep.mubr.bf16.mxu0 0
        %2557 = vmatmul.mubr.bf16.gmra.mxu0 %v1649
        %v2558 = vpop.f32.mrf.mxu0
        %v2559 = vadd.f32 %v2007, %v2558
        %v2560 = vpop.f32.mrf.mxu0
        %v2561 = vpop.f32.mrf.mxu0
        %v2562 = vadd.f32 %v2010, %v2561
        %v2563 = vpop.f32.mrf.mxu0
        %2564 = vmatprep.mubr.bf16.mxu0 0
        %2565 = vmatmul.mubr.bf16.gmra.mxu0 %v1652
        %v2566 = vpop.f32.mrf.mxu0
        %v2567 = vadd.f32 %v2015, %v2566
        %v2568 = vpop.f32.mrf.mxu0
        %v2569 = vpop.f32.mrf.mxu0
        %v2570 = vadd.f32 %v2018, %v2569
        %v2571 = vpop.f32.mrf.mxu0
        %2572 = vmatprep.mubr.bf16.mxu0 0
        %2573 = vmatmul.mubr.bf16.gmra.mxu0 %v1655
        %v2574 = vpop.f32.mrf.mxu0
        %v2575 = vadd.f32 %v2023, %v2574
        %v2576 = vpop.f32.mrf.mxu0
        %v2577 = vpop.f32.mrf.mxu0
        %v2578 = vadd.f32 %v2026, %v2577
        %v2579 = vpop.f32.mrf.mxu0
        %2580 = vmatprep.mubr.bf16.mxu0 0
        %2581 = vmatmul.mubr.bf16.gmra.mxu0 %v1658
        %v2582 = vpop.f32.mrf.mxu0
        %v2583 = vadd.f32 %v2031, %v2582
        %v2584 = vpop.f32.mrf.mxu0
        %v2585 = vpop.f32.mrf.mxu0
        %v2586 = vadd.f32 %v2034, %v2585
        %v2587 = vpop.f32.mrf.mxu0
        %2588 = vmatprep.mubr.bf16.mxu0 0
        %2589 = vmatmul.mubr.bf16.gmra.mxu0 %v1661
        %v2590 = vpop.f32.mrf.mxu0
        %v2591 = vadd.f32 %v2039, %v2590
        %v2592 = vpop.f32.mrf.mxu0
        %v2593 = vpop.f32.mrf.mxu0
        %v2594 = vadd.f32 %v2042, %v2593
        %v2595 = vpop.f32.mrf.mxu0
        %2596 = vmatprep.mubr.bf16.mxu0 0
        %2597 = vmatmul.mubr.bf16.gmra.mxu0 %v1664
        %v2598 = vpop.f32.mrf.mxu0
        %v2599 = vadd.f32 %v2047, %v2598
        %v2600 = vpop.f32.mrf.mxu0
        %v2601 = vpop.f32.mrf.mxu0
        %v2602 = vadd.f32 %v2050, %v2601
        %v2603 = vpop.f32.mrf.mxu0
        %2604 = vmatprep.mubr.bf16.mxu0 0
        %2605 = vmatmul.mubr.bf16.gmra.mxu0 %v1667
        %v2606 = vpop.f32.mrf.mxu0
        %v2607 = vadd.f32 %v2055, %v2606
        %v2608 = vpop.f32.mrf.mxu0
        %v2609 = vpop.f32.mrf.mxu0
        %v2610 = vadd.f32 %v2058, %v2609
        %v2611 = vpop.f32.mrf.mxu0
        %2612 = vmatprep.mubr.bf16.mxu0 0
        %2613 = vmatmul.mubr.bf16.gmra.mxu0 %v1670
        %v2614 = vpop.f32.mrf.mxu0
        %v2615 = vadd.f32 %v2063, %v2614
        %v2616 = vpop.f32.mrf.mxu0
        %v2617 = vpop.f32.mrf.mxu0
        %v2618 = vadd.f32 %v2066, %v2617
        %v2619 = vpop.f32.mrf.mxu0
        %2620 = vmatprep.mubr.bf16.mxu0 0
        %2621 = vmatmul.mubr.bf16.gmra.mxu0 %v1673
        %v2622 = vpop.f32.mrf.mxu0
        %v2623 = vadd.f32 %v2071, %v2622
        %v2624 = vpop.f32.mrf.mxu0
        %v2625 = vpop.f32.mrf.mxu0
        %v2626 = vadd.f32 %v2074, %v2625
        %v2627 = vpop.f32.mrf.mxu0
        %2628 = vmatprep.mubr.bf16.mxu0 0
        %2629 = vmatmul.mubr.bf16.gmra.mxu0 %v1676
        %v2630 = vpop.f32.mrf.mxu0
        %v2631 = vadd.f32 %v2079, %v2630
        %v2632 = vpop.f32.mrf.mxu0
        %v2633 = vpop.f32.mrf.mxu0
        %v2634 = vadd.f32 %v2082, %v2633
        %v2635 = vpop.f32.mrf.mxu0
        %2636 = vmatprep.mubr.bf16.mxu0 0
        %2637 = vmatmul.mubr.bf16.gmra.mxu0 %v1679
        %v2638 = vpop.f32.mrf.mxu0
        %v2639 = vadd.f32 %v2087, %v2638
        %v2640 = vpop.f32.mrf.mxu0
        %v2641 = vpop.f32.mrf.mxu0
        %v2642 = vadd.f32 %v2090, %v2641
        %v2643 = vpop.f32.mrf.mxu0
        %2644 = vmatprep.mubr.bf16.mxu0 0
        %2645 = vmatmul.mubr.bf16.gmra.mxu0 %v1682
        %v2646 = vpop.f32.mrf.mxu0
        %v2647 = vadd.f32 %v2095, %v2646
        %v2648 = vpop.f32.mrf.mxu0
        %v2649 = vpop.f32.mrf.mxu0
        %v2650 = vadd.f32 %v2098, %v2649
        %v2651 = vpop.f32.mrf.mxu0
        %2652 = vmatprep.mubr.bf16.mxu0 0
        %2653 = vmatmul.mubr.bf16.gmra.mxu0 %v1685
        %v2654 = vpop.f32.mrf.mxu0
        %v2655 = vadd.f32 %v2103, %v2654
        %v2656 = vpop.f32.mrf.mxu0
        %v2657 = vpop.f32.mrf.mxu0
        %v2658 = vadd.f32 %v2106, %v2657
        %v2659 = vpop.f32.mrf.mxu0
        %2660 = vmatprep.mubr.bf16.mxu0 0
        %2661 = vmatmul.mubr.bf16.gmra.mxu0 %v1688
        %v2662 = vpop.f32.mrf.mxu0
        %v2663 = vadd.f32 %v2111, %v2662
        %v2664 = vpop.f32.mrf.mxu0
        %v2665 = vpop.f32.mrf.mxu0
        %v2666 = vadd.f32 %v2114, %v2665
        %v2667 = vpop.f32.mrf.mxu0
        %2668 = vmatprep.mubr.bf16.mxu0 0
        %2669 = vmatmul.mubr.bf16.gmra.mxu0 %v1691
        %v2670 = vpop.f32.mrf.mxu0
        %v2671 = vadd.f32 %v2119, %v2670
        %v2672 = vpop.f32.mrf.mxu0
        %v2673 = vpop.f32.mrf.mxu0
        %v2674 = vadd.f32 %v2122, %v2673
        %v2675 = vpop.f32.mrf.mxu0
        %2676 = vmatprep.mubr.bf16.mxu0 0
        %2677 = vmatmul.mubr.bf16.gmra.mxu0 %v1694
        %v2678 = vpop.f32.mrf.mxu0
        %v2679 = vadd.f32 %v2127, %v2678
        %v2680 = vpop.f32.mrf.mxu0
        %v2681 = vpop.f32.mrf.mxu0
        %v2682 = vadd.f32 %v2130, %v2681
        %v2683 = vpop.f32.mrf.mxu0
        %2684 = vmatprep.mubr.bf16.mxu0 0
        %2685 = vmatmul.mubr.bf16.gmra.mxu0 %v1697
        %v2686 = vpop.f32.mrf.mxu0
        %v2687 = vadd.f32 %v2135, %v2686
        %v2688 = vpop.f32.mrf.mxu0
        %v2689 = vpop.f32.mrf.mxu0
        %v2690 = vadd.f32 %v2138, %v2689
        %v2691 = vpop.f32.mrf.mxu0
        %2692 = vmatprep.mubr.bf16.mxu0 0
        %2693 = vmatmul.mubr.bf16.gmra.mxu0 %v1700
        %v2694 = vpop.f32.mrf.mxu0
        %v2695 = vadd.f32 %v2143, %v2694
        %v2696 = vpop.f32.mrf.mxu0
        %v2697 = vpop.f32.mrf.mxu0
        %v2698 = vadd.f32 %v2146, %v2697
        %v2699 = vpop.f32.mrf.mxu0
        %2700 = vmatprep.mubr.bf16.mxu0 0
        %2701 = vmatmul.mubr.bf16.gmra.mxu0 %v1703
        %v2702 = vpop.f32.mrf.mxu0
        %v2703 = vadd.f32 %v2151, %v2702
        %v2704 = vpop.f32.mrf.mxu0
        %v2705 = vpop.f32.mrf.mxu0
        %v2706 = vadd.f32 %v2154, %v2705
        %v2707 = vpop.f32.mrf.mxu0
        %2708 = vmatprep.mubr.bf16.mxu0 0
        %2709 = vmatmul.mubr.bf16.gmra.mxu0 %v1706
        %v2710 = vpop.f32.mrf.mxu0
        %v2711 = vadd.f32 %v2159, %v2710
        %v2712 = vpop.f32.mrf.mxu0
        %v2713 = vpop.f32.mrf.mxu0
        %v2714 = vadd.f32 %v2162, %v2713
        %v2715 = vpop.f32.mrf.mxu0
        %2716 = vmatprep.mubr.bf16.mxu0 0
        %2717 = vmatmul.mubr.bf16.gmra.mxu0 %v1709
        %v2718 = vpop.f32.mrf.mxu0
        %v2719 = vadd.f32 %v2167, %v2718
        %v2720 = vpop.f32.mrf.mxu0
        %v2721 = vpop.f32.mrf.mxu0
        %v2722 = vadd.f32 %v2170, %v2721
        %v2723 = vpop.f32.mrf.mxu0
        %2724 = vmatprep.mubr.bf16.mxu0 0
        %2725 = vmatmul.mubr.bf16.gmra.mxu0 %v1712
        %v2726 = vpop.f32.mrf.mxu0
        %v2727 = vadd.f32 %v2175, %v2726
        %v2728 = vpop.f32.mrf.mxu0
        %v2729 = vpop.f32.mrf.mxu0
        %v2730 = vadd.f32 %v2178, %v2729
        %v2731 = vpop.f32.mrf.mxu0
        %2732 = vmatprep.mubr.bf16.mxu0 0
        %2733 = vmatmul.mubr.bf16.gmra.mxu0 %v1715
        %v2734 = vpop.f32.mrf.mxu0
        %v2735 = vadd.f32 %v2183, %v2734
        %v2736 = vpop.f32.mrf.mxu0
        %v2737 = vpop.f32.mrf.mxu0
        %v2738 = vadd.f32 %v2186, %v2737
        %v2739 = vpop.f32.mrf.mxu0
        %2740 = vmatprep.mubr.bf16.mxu0 0
        %2741 = vmatmul.mubr.bf16.gmra.mxu0 %v1718
        %v2742 = vpop.f32.mrf.mxu0
        %v2743 = vadd.f32 %v2191, %v2742
        %v2744 = vpop.f32.mrf.mxu0
        %v2745 = vpop.f32.mrf.mxu0
        %v2746 = vadd.f32 %v2194, %v2745
        %v2747 = vpop.f32.mrf.mxu0
        %2748 = vmatprep.mubr.bf16.mxu0 0
        %2749 = vmatmul.mubr.bf16.gmra.mxu0 %v1721
        %v2750 = vpop.f32.mrf.mxu0
        %v2751 = vadd.f32 %v2199, %v2750
        %v2752 = vpop.f32.mrf.mxu0
        %v2753 = vpop.f32.mrf.mxu0
        %v2754 = vadd.f32 %v2202, %v2753
        %v2755 = vpop.f32.mrf.mxu0
        %2756 = vmatprep.mubr.bf16.mxu0 0
        %2757 = vmatmul.mubr.bf16.gmra.mxu0 %v1724
        %v2758 = vpop.f32.mrf.mxu0
        %v2759 = vadd.f32 %v2207, %v2758
        %v2760 = vpop.f32.mrf.mxu0
        %v2761 = vpop.f32.mrf.mxu0
        %v2762 = vadd.f32 %v2210, %v2761
        %v2763 = vpop.f32.mrf.mxu0
        %2764 = vmatprep.mubr.bf16.mxu0 0
        %2765 = vmatmul.mubr.bf16.gmra.mxu0 %v1727
        %v2766 = vpop.f32.mrf.mxu0
        %v2767 = vadd.f32 %v2215, %v2766
        %v2768 = vpop.f32.mrf.mxu0
        %v2769 = vpop.f32.mrf.mxu0
        %v2770 = vadd.f32 %v2218, %v2769
        %v2771 = vpop.f32.mrf.mxu0
        %2772 = vmatprep.mubr.bf16.mxu0 0
        %2773 = vmatmul.mubr.bf16.gmra.mxu0 %v1730
        %v2774 = vpop.f32.mrf.mxu0
        %v2775 = vadd.f32 %v2223, %v2774
        %v2776 = vpop.f32.mrf.mxu0
        %v2777 = vpop.f32.mrf.mxu0
        %v2778 = vadd.f32 %v2226, %v2777
        %v2779 = vpop.f32.mrf.mxu0
        %2780 = vmatprep.mubr.bf16.mxu0 0
        %2781 = vmatmul.mubr.bf16.gmra.mxu0 %v1733
        %v2782 = vpop.f32.mrf.mxu0
        %v2783 = vadd.f32 %v2231, %v2782
        %v2784 = vpop.f32.mrf.mxu0
        %v2785 = vpop.f32.mrf.mxu0
        %v2786 = vadd.f32 %v2234, %v2785
        %v2787 = vpop.f32.mrf.mxu0
        %2788 = vmatprep.mubr.bf16.mxu0 0
        %2789 = vmatmul.mubr.bf16.gmra.mxu0 %v1736
        %v2790 = vpop.f32.mrf.mxu0
        %v2791 = vadd.f32 %v2239, %v2790
        %v2792 = vpop.f32.mrf.mxu0
        %v2793 = vpop.f32.mrf.mxu0
        %v2794 = vadd.f32 %v2242, %v2793
        %v2795 = vpop.f32.mrf.mxu0
        %2796 = vmatprep.mubr.bf16.mxu0 0
        %2797 = vmatmul.mubr.bf16.gmra.mxu0 %v1739
        %v2798 = vpop.f32.mrf.mxu0
        %v2799 = vadd.f32 %v2247, %v2798
        %v2800 = vpop.f32.mrf.mxu0
        %v2801 = vpop.f32.mrf.mxu0
        %v2802 = vadd.f32 %v2250, %v2801
        %v2803 = vpop.f32.mrf.mxu0
        %2804 = vmatprep.mubr.bf16.mxu0 0
        %2805 = vmatmul.mubr.bf16.gmra.mxu0 %v1742
        %v2806 = vpop.f32.mrf.mxu0
        %v2807 = vadd.f32 %v2255, %v2806
        %v2808 = vpop.f32.mrf.mxu0
        %v2809 = vpop.f32.mrf.mxu0
        %v2810 = vadd.f32 %v2258, %v2809
        %v2811 = vpop.f32.mrf.mxu0
        %2812 = vmatprep.mubr.bf16.mxu0 0
        %2813 = vmatmul.mubr.bf16.gmra.mxu0 %v1745
        %v2814 = vpop.f32.mrf.mxu0
        %v2815 = vadd.f32 %v2263, %v2814
        %v2816 = vpop.f32.mrf.mxu0
        %v2817 = vpop.f32.mrf.mxu0
        %v2818 = vadd.f32 %v2266, %v2817
        %v2819 = vpop.f32.mrf.mxu0
        %2820 = vmatprep.mubr.bf16.mxu0 0
        %2821 = vmatmul.mubr.bf16.gmra.mxu0 %v1748
        %v2822 = vpop.f32.mrf.mxu0
        %v2823 = vadd.f32 %v2271, %v2822
        %v2824 = vpop.f32.mrf.mxu0
        %v2825 = vpop.f32.mrf.mxu0
        %v2826 = vadd.f32 %v2274, %v2825
        %v2827 = vpop.f32.mrf.mxu0
        %2828 = vmatprep.mubr.bf16.mxu0 0
        %2829 = vmatmul.mubr.bf16.gmra.mxu0 %v1751
        %v2830 = vpop.f32.mrf.mxu0
        %v2831 = vadd.f32 %v2279, %v2830
        %v2832 = vpop.f32.mrf.mxu0
        %v2833 = vpop.f32.mrf.mxu0
        %v2834 = vadd.f32 %v2282, %v2833
        %v2835 = vpop.f32.mrf.mxu0
        %2836 = vmatprep.mubr.bf16.mxu0 0
        %2837 = vmatmul.mubr.bf16.gmra.mxu0 %v1754
        %v2838 = vpop.f32.mrf.mxu0
        %v2839 = vadd.f32 %v2287, %v2838
        %v2840 = vpop.f32.mrf.mxu0
        %v2841 = vpop.f32.mrf.mxu0
        %v2842 = vadd.f32 %v2290, %v2841
        %v2843 = vpop.f32.mrf.mxu0
        %2844 = vmatprep.mubr.bf16.mxu0 0
        %2845 = vmatmul.mubr.bf16.gmra.mxu0 %v1757
        %v2846 = vpop.f32.mrf.mxu0
        %v2847 = vadd.f32 %v2295, %v2846
        %v2848 = vpop.f32.mrf.mxu0
        %v2849 = vpop.f32.mrf.mxu0
        %v2850 = vadd.f32 %v2298, %v2849
        %v2851 = vpop.f32.mrf.mxu0
        %2852 = vmatprep.mubr.bf16.mxu0 0
        %2853 = vmatmul.mubr.bf16.gmra.mxu0 %v1760
        %v2854 = vpop.f32.mrf.mxu0
        %v2855 = vadd.f32 %v2303, %v2854
        %v2856 = vpop.f32.mrf.mxu0
        %v2857 = vpop.f32.mrf.mxu0
        %v2858 = vadd.f32 %v2306, %v2857
        %v2859 = vpop.f32.mrf.mxu0
        %2860 = vmatprep.mubr.bf16.mxu0 0
        %2861 = vmatmul.mubr.bf16.gmra.mxu0 %v1763
        %v2862 = vpop.f32.mrf.mxu0
        %v2863 = vadd.f32 %v2311, %v2862
        %v2864 = vpop.f32.mrf.mxu0
        %v2865 = vpop.f32.mrf.mxu0
        %v2866 = vadd.f32 %v2314, %v2865
        %v2867 = vpop.f32.mrf.mxu0
        %2868 = vmatprep.mubr.bf16.mxu0 0
        %2869 = vmatmul.mubr.bf16.gmra.mxu0 %v1766
        %v2870 = vpop.f32.mrf.mxu0
        %v2871 = vadd.f32 %v2319, %v2870
        %v2872 = vpop.f32.mrf.mxu0
        %v2873 = vpop.f32.mrf.mxu0
        %v2874 = vpop.f32.mrf.mxu0
        %2875 = vdwg.mxu0
        %vm2876 = vcmask 400384
        %2877 = vst.msk [vmem:[%s190] sm:$0xff] %vm2876, %v2359
        %2878 = vst.msk [vmem:[%s190 + $0x8] sm:$0xff] %vm2876, %v2362
        %2879 = vst.msk [vmem:[%s190 + $0x10] sm:$0xff] %vm2876, %v2367
        %2880 = vst.msk [vmem:[%s190 + $0x18] sm:$0xff] %vm2876, %v2370
        %2881 = vst.msk [vmem:[%s190 + $0x20] sm:$0xff] %vm2876, %v2375
        %2882 = vst.msk [vmem:[%s190 + $0x28] sm:$0xff] %vm2876, %v2378
        %2883 = vst.msk [vmem:[%s190 + $0x30] sm:$0xff] %vm2876, %v2383
        %2884 = vst.msk [vmem:[%s190 + $0x38] sm:$0xff] %vm2876, %v2386
        %2885 = vst.msk [vmem:[%s190 + $0x40] sm:$0xff] %vm2876, %v2391
        %2886 = vst.msk [vmem:[%s190 + $0x48] sm:$0xff] %vm2876, %v2394
        %2887 = vst.msk [vmem:[%s190 + $0x50] sm:$0xff] %vm2876, %v2399
        %2888 = vst.msk [vmem:[%s190 + $0x58] sm:$0xff] %vm2876, %v2402
        %2889 = vst.msk [vmem:[%s190 + $0x60] sm:$0xff] %vm2876, %v2407
        %2890 = vst.msk [vmem:[%s190 + $0x68] sm:$0xff] %vm2876, %v2410
        %2891 = vst.msk [vmem:[%s190 + $0x70] sm:$0xff] %vm2876, %v2415
        %2892 = vst.msk [vmem:[%s190 + $0x78] sm:$0xff] %vm2876, %v2418
        %2893 = vst.msk [vmem:[%s190 + $0x80] sm:$0xff] %vm2876, %v2423
        %2894 = vst.msk [vmem:[%s190 + $0x88] sm:$0xff] %vm2876, %v2426
        %2895 = vst.msk [vmem:[%s190 + $0x90] sm:$0xff] %vm2876, %v2431
        %2896 = vst.msk [vmem:[%s190 + $0x98] sm:$0xff] %vm2876, %v2434
        %2897 = vst.msk [vmem:[%s190 + $0xa0] sm:$0xff] %vm2876, %v2439
        %2898 = vst.msk [vmem:[%s190 + $0xa8] sm:$0xff] %vm2876, %v2442
        %2899 = vst.msk [vmem:[%s190 + $0xb0] sm:$0xff] %vm2876, %v2447
        %2900 = vst.msk [vmem:[%s190 + $0xb8] sm:$0xff] %vm2876, %v2450
        %2901 = vst.msk [vmem:[%s190 + $0xc0] sm:$0xff] %vm2876, %v2455
        %2902 = vst.msk [vmem:[%s190 + $0xc8] sm:$0xff] %vm2876, %v2458
        %2903 = vst.msk [vmem:[%s190 + $0xd0] sm:$0xff] %vm2876, %v2463
        %2904 = vst.msk [vmem:[%s190 + $0xd8] sm:$0xff] %vm2876, %v2466
        %2905 = vst.msk [vmem:[%s190 + $0xe0] sm:$0xff] %vm2876, %v2471
        %2906 = vst.msk [vmem:[%s190 + $0xe8] sm:$0xff] %vm2876, %v2474
        %2907 = vst.msk [vmem:[%s190 + $0xf0] sm:$0xff] %vm2876, %v2479
        %2908 = vst.msk [vmem:[%s190 + $0xf8] sm:$0xff] %vm2876, %v2482
        %2909 = vst.msk [vmem:[%s190 + $0x100] sm:$0xff] %vm2876, %v2487
        %2910 = vst.msk [vmem:[%s190 + $0x108] sm:$0xff] %vm2876, %v2490
        %2911 = vst.msk [vmem:[%s190 + $0x110] sm:$0xff] %vm2876, %v2495
        %2912 = vst.msk [vmem:[%s190 + $0x118] sm:$0xff] %vm2876, %v2498
        %2913 = vst.msk [vmem:[%s190 + $0x120] sm:$0xff] %vm2876, %v2503
        %2914 = vst.msk [vmem:[%s190 + $0x128] sm:$0xff] %vm2876, %v2506
        %2915 = vst.msk [vmem:[%s190 + $0x130] sm:$0xff] %vm2876, %v2511
        %2916 = vst.msk [vmem:[%s190 + $0x138] sm:$0xff] %vm2876, %v2514
        %2917 = vst.msk [vmem:[%s190 + $0x140] sm:$0xff] %vm2876, %v2519
        %2918 = vst.msk [vmem:[%s190 + $0x148] sm:$0xff] %vm2876, %v2522
        %2919 = vst.msk [vmem:[%s190 + $0x150] sm:$0xff] %vm2876, %v2527
        %2920 = vst.msk [vmem:[%s190 + $0x158] sm:$0xff] %vm2876, %v2530
        %2921 = vst.msk [vmem:[%s190 + $0x160] sm:$0xff] %vm2876, %v2535
        %2922 = vst.msk [vmem:[%s190 + $0x168] sm:$0xff] %vm2876, %v2538
        %2923 = vst.msk [vmem:[%s190 + $0x170] sm:$0xff] %vm2876, %v2543
        %2924 = vst.msk [vmem:[%s190 + $0x178] sm:$0xff] %vm2876, %v2546
        %2925 = vst.msk [vmem:[%s190 + $0x180] sm:$0xff] %vm2876, %v2551
        %2926 = vst.msk [vmem:[%s190 + $0x188] sm:$0xff] %vm2876, %v2554
        %2927 = vst.msk [vmem:[%s190 + $0x190] sm:$0xff] %vm2876, %v2559
        %2928 = vst.msk [vmem:[%s190 + $0x198] sm:$0xff] %vm2876, %v2562
        %2929 = vst.msk [vmem:[%s190 + $0x1a0] sm:$0xff] %vm2876, %v2567
        %2930 = vst.msk [vmem:[%s190 + $0x1a8] sm:$0xff] %vm2876, %v2570
        %2931 = vst.msk [vmem:[%s190 + $0x1b0] sm:$0xff] %vm2876, %v2575
        %2932 = vst.msk [vmem:[%s190 + $0x1b8] sm:$0xff] %vm2876, %v2578
        %2933 = vst.msk [vmem:[%s190 + $0x1c0] sm:$0xff] %vm2876, %v2583
        %2934 = vst.msk [vmem:[%s190 + $0x1c8] sm:$0xff] %vm2876, %v2586
        %2935 = vst.msk [vmem:[%s190 + $0x1d0] sm:$0xff] %vm2876, %v2591
        %2936 = vst.msk [vmem:[%s190 + $0x1d8] sm:$0xff] %vm2876, %v2594
        %2937 = vst.msk [vmem:[%s190 + $0x1e0] sm:$0xff] %vm2876, %v2599
        %2938 = vst.msk [vmem:[%s190 + $0x1e8] sm:$0xff] %vm2876, %v2602
        %2939 = vst.msk [vmem:[%s190 + $0x1f0] sm:$0xff] %vm2876, %v2607
        %2940 = vst.msk [vmem:[%s190 + $0x1f8] sm:$0xff] %vm2876, %v2610
        %2941 = vst.msk [vmem:[%s190 + $0x200] sm:$0xff] %vm2876, %v2615
        %2942 = vst.msk [vmem:[%s190 + $0x208] sm:$0xff] %vm2876, %v2618
        %2943 = vst.msk [vmem:[%s190 + $0x210] sm:$0xff] %vm2876, %v2623
        %2944 = vst.msk [vmem:[%s190 + $0x218] sm:$0xff] %vm2876, %v2626
        %2945 = vst.msk [vmem:[%s190 + $0x220] sm:$0xff] %vm2876, %v2631
        %2946 = vst.msk [vmem:[%s190 + $0x228] sm:$0xff] %vm2876, %v2634
        %2947 = vst.msk [vmem:[%s190 + $0x230] sm:$0xff] %vm2876, %v2639
        %2948 = vst.msk [vmem:[%s190 + $0x238] sm:$0xff] %vm2876, %v2642
        %2949 = vst.msk [vmem:[%s190 + $0x240] sm:$0xff] %vm2876, %v2647
        %2950 = vst.msk [vmem:[%s190 + $0x248] sm:$0xff] %vm2876, %v2650
        %2951 = vst.msk [vmem:[%s190 + $0x250] sm:$0xff] %vm2876, %v2655
        %2952 = vst.msk [vmem:[%s190 + $0x258] sm:$0xff] %vm2876, %v2658
        %2953 = vst.msk [vmem:[%s190 + $0x260] sm:$0xff] %vm2876, %v2663
        %2954 = vst.msk [vmem:[%s190 + $0x268] sm:$0xff] %vm2876, %v2666
        %2955 = vst.msk [vmem:[%s190 + $0x270] sm:$0xff] %vm2876, %v2671
        %2956 = vst.msk [vmem:[%s190 + $0x278] sm:$0xff] %vm2876, %v2674
        %2957 = vst.msk [vmem:[%s190 + $0x280] sm:$0xff] %vm2876, %v2679
        %2958 = vst.msk [vmem:[%s190 + $0x288] sm:$0xff] %vm2876, %v2682
        %2959 = vst.msk [vmem:[%s190 + $0x290] sm:$0xff] %vm2876, %v2687
        %2960 = vst.msk [vmem:[%s190 + $0x298] sm:$0xff] %vm2876, %v2690
        %2961 = vst.msk [vmem:[%s190 + $0x2a0] sm:$0xff] %vm2876, %v2695
        %2962 = vst.msk [vmem:[%s190 + $0x2a8] sm:$0xff] %vm2876, %v2698
        %2963 = vst.msk [vmem:[%s190 + $0x2b0] sm:$0xff] %vm2876, %v2703
        %2964 = vst.msk [vmem:[%s190 + $0x2b8] sm:$0xff] %vm2876, %v2706
        %2965 = vst.msk [vmem:[%s190 + $0x2c0] sm:$0xff] %vm2876, %v2711
        %2966 = vst.msk [vmem:[%s190 + $0x2c8] sm:$0xff] %vm2876, %v2714
        %2967 = vst.msk [vmem:[%s190 + $0x2d0] sm:$0xff] %vm2876, %v2719
        %2968 = vst.msk [vmem:[%s190 + $0x2d8] sm:$0xff] %vm2876, %v2722
        %2969 = vst.msk [vmem:[%s190 + $0x2e0] sm:$0xff] %vm2876, %v2727
        %2970 = vst.msk [vmem:[%s190 + $0x2e8] sm:$0xff] %vm2876, %v2730
        %2971 = vst.msk [vmem:[%s190 + $0x2f0] sm:$0xff] %vm2876, %v2735
        %2972 = vst.msk [vmem:[%s190 + $0x2f8] sm:$0xff] %vm2876, %v2738
        %2973 = vst.msk [vmem:[%s190 + $0x300] sm:$0xff] %vm2876, %v2743
        %2974 = vst.msk [vmem:[%s190 + $0x308] sm:$0xff] %vm2876, %v2746
        %2975 = vst.msk [vmem:[%s190 + $0x310] sm:$0xff] %vm2876, %v2751
        %2976 = vst.msk [vmem:[%s190 + $0x318] sm:$0xff] %vm2876, %v2754
        %2977 = vst.msk [vmem:[%s190 + $0x320] sm:$0xff] %vm2876, %v2759
        %2978 = vst.msk [vmem:[%s190 + $0x328] sm:$0xff] %vm2876, %v2762
        %2979 = vst.msk [vmem:[%s190 + $0x330] sm:$0xff] %vm2876, %v2767
        %2980 = vst.msk [vmem:[%s190 + $0x338] sm:$0xff] %vm2876, %v2770
        %2981 = vst.msk [vmem:[%s190 + $0x340] sm:$0xff] %vm2876, %v2775
        %2982 = vst.msk [vmem:[%s190 + $0x348] sm:$0xff] %vm2876, %v2778
        %2983 = vst.msk [vmem:[%s190 + $0x350] sm:$0xff] %vm2876, %v2783
        %2984 = vst.msk [vmem:[%s190 + $0x358] sm:$0xff] %vm2876, %v2786
        %2985 = vst.msk [vmem:[%s190 + $0x360] sm:$0xff] %vm2876, %v2791
        %2986 = vst.msk [vmem:[%s190 + $0x368] sm:$0xff] %vm2876, %v2794
        %2987 = vst.msk [vmem:[%s190 + $0x370] sm:$0xff] %vm2876, %v2799
        %2988 = vst.msk [vmem:[%s190 + $0x378] sm:$0xff] %vm2876, %v2802
        %2989 = vst.msk [vmem:[%s190 + $0x380] sm:$0xff] %vm2876, %v2807
        %2990 = vst.msk [vmem:[%s190 + $0x388] sm:$0xff] %vm2876, %v2810
        %2991 = vst.msk [vmem:[%s190 + $0x390] sm:$0xff] %vm2876, %v2815
        %2992 = vst.msk [vmem:[%s190 + $0x398] sm:$0xff] %vm2876, %v2818
        %2993 = vst.msk [vmem:[%s190 + $0x3a0] sm:$0xff] %vm2876, %v2823
        %2994 = vst.msk [vmem:[%s190 + $0x3a8] sm:$0xff] %vm2876, %v2826
        %2995 = vst.msk [vmem:[%s190 + $0x3b0] sm:$0xff] %vm2876, %v2831
        %2996 = vst.msk [vmem:[%s190 + $0x3b8] sm:$0xff] %vm2876, %v2834
        %2997 = vst.msk [vmem:[%s190 + $0x3c0] sm:$0xff] %vm2876, %v2839
        %2998 = vst.msk [vmem:[%s190 + $0x3c8] sm:$0xff] %vm2876, %v2842
        %2999 = vst.msk [vmem:[%s190 + $0x3d0] sm:$0xff] %vm2876, %v2847
        %3000 = vst.msk [vmem:[%s190 + $0x3d8] sm:$0xff] %vm2876, %v2850
        %3001 = vst.msk [vmem:[%s190 + $0x3e0] sm:$0xff] %vm2876, %v2855
        %3002 = vst.msk [vmem:[%s190 + $0x3e8] sm:$0xff] %vm2876, %v2858
        %3003 = vst.msk [vmem:[%s190 + $0x3f0] sm:$0xff] %vm2876, %v2863
        %3004 = vst.msk [vmem:[%s190 + $0x3f8] sm:$0xff] %vm2876, %v2866
        %3005 = vst.msk [vmem:[%s190 + $0x400] sm:$0xff] %vm2876, %v2871
        %s3006 = smul.u32 129, %s17
        %p3007 = scmp.lt.s32.totalorder %s3006, 257
        %s3008 = scalar_select %p3007, %s3006, 257
        %s3009 = smul.addr %s3008, 8
        %s3010 = scalar_lea.vmem %s3, %s3009
        // Predicated region
        $region37: #{tpu_custom_call.1} parent=31 // pred_check
          %p3011 = pneg %p103
        $region38: #{tpu_custom_call.1} parent=31 // pred_check_branch
          %3013 = sbr.rel (%p3011) target = $region40
        $region39: #{tpu_custom_call.1} parent=31 // pred_region
          %s3014 = smul.u32 129, %s17
        $region40: #{tpu_custom_call.1} parent=31 // pred_fallthru
          _
      $region32: #{tpu_custom_call.1} parent=5 // pred_fallthru
        _
      %p3015 = scmp.le.s32.totalorder 2, %s12
      // Predicated region
      $region41: #{tpu_custom_call.1} parent=5 // pred_check
        %p3016 = pneg %p3015
      $region42: #{tpu_custom_call.1} parent=5 // pred_check_branch
        %3018 = sbr.rel (%p3016) target = $region44
      $region43: #{tpu_custom_call.1} parent=5 // pred_region
        %s3019 = ssub.s32 %s12, 2
        // Predicated region
        $region45: #{tpu_custom_call.1} parent=43 // pred_check
          %p3020 = pneg %p109
        $region46: #{tpu_custom_call.1} parent=43 // pred_check_branch
          %3022 = sbr.rel (%p3020) target = $region48
        $region47: #{tpu_custom_call.1} parent=43 // pred_region
          %s3023 = smul.u32 129, %s18
          %p3024 = scmp.lt.s32.totalorder %s3023, 257
          %s3025 = scalar_select %p3024, %s3023, 257
          %s3026 = smul.addr %s3025, 8
          %s3027 = scalar_lea.vmem %s3, %s3026
        $region48: #{tpu_custom_call.1} parent=43 // pred_fallthru
          _
      $region44: #{tpu_custom_call.1} parent=5 // pred_fallthru
        _
    $region6: #{tpu_custom_call.1} parent=1 // loop_footer
      %s16 = sadd.s32 1, %s12
    $region7: #{tpu_custom_call.1} parent=1 // loop_footer_branch
      %11 = sbr.rel target = $region3
    $region8: #{tpu_custom_call.1} parent=1 // loop_exit
      _
    %3028 = vsyncpa [#allocation3], 1
    %s3029 = scalar_lea.sflag [#allocation3], 1
    %3030 = vsyncpa %s3029, 1

</llo_original>
